<compile_context>
chip_gen: v7x
topology: tpu7x:2x2x1
jax: 0.10.0
libtpu: 0.0.40
codegen_flags: <defaults>
</compile_context>

<pallas_src>
import functools
import math

import numpy as np
import jax
import jax.numpy as jnp
from jax.experimental import pallas as pl
from jax.experimental.pallas import tpu as pltpu


_SQRT_HALF = 0.7071067811865476
_TAP_OFFSETS = tuple((dy, dx) for dy in (-1, 0, 1) for dx in (-1, 0, 1))


def _erf(x):
    # Abramowitz & Stegun 7.1.26 polynomial (max abs err ~1.5e-7, i.e.
    # exact at float32 precision).
    p = 0.3275911
    a1, a2, a3, a4, a5 = (0.254829592, -0.284496736, 1.421413741,
                          -1.453152027, 1.061405429)
    ax = jnp.abs(x)
    d = 1.0 + p * ax
    t = pl.reciprocal(d, approx=True)   # EUP slot
    t = t * (2.0 - d * t)               # one Newton step -> ~f32-exact 1/d
    poly = t * (a1 + t * (a2 + t * (a3 + t * (a4 + t * a5))))
    e = 1.0 - poly * jnp.exp(-ax * ax)
    return jnp.where(x >= 0.0, e, -e)


def _gelu_exact(x):
    # Matches torch.nn.GELU() (erf formulation).
    return 0.5 * x * (1.0 + _erf(x * _SQRT_HALF))


def mixblock_kernel(ab_ref, x_ref, w_ref, m_ref, o_ref, cols_ref, *,
                    width, c_pad):
    # ab_ref  : SMEM (2,)                [alpha, beta]
    # x_ref   : VMEM (Cp, N)             images concatenated along lanes,
    #                                    channels zero-padded to Cp
    # w_ref   : VMEM (4, Cp, 9*Cp)       packed per-stage weights
    # m_ref   : VMEM (9, 1, N)           per-tap validity masks (0. / 1.)
    # o_ref   : VMEM (Cp, N)
    # cols_ref: VMEM (9*Cp, N) scratch   im2col operand (tile-aligned rows)
    _, N = x_ref.shape

    def build_im2col(y):
        # 9 lane-rolled, masked taps written into aligned scratch rows.
        for k, (dy, dx) in enumerate(_TAP_OFFSETS):
            s = dy * width + dx
            if s == 0:
                tap = y                                        # centre tap
            else:
                # shifted[:, n] = y[:, (n + s) mod N]; invalid lanes zeroed.
                tap = pltpu.roll(y, (-s) % N, axis=1) * m_ref[k]
            cols_ref[k * c_pad:(k + 1) * c_pad, :] = tap

    def conv_gelu(stage):
        # One MXU matmul per conv stage (f32 accumulation).
        acc = jnp.dot(w_ref[stage], cols_ref[...],
                      preferred_element_type=jnp.float32)
        return _gelu_exact(acc)

    build_im2col(x_ref[...])      # shared by both convs that consume x
    b1 = conv_gelu(0)             # branch 1
    y = conv_gelu(1)              # branch 2, stage 1
    build_im2col(y)
    y = conv_gelu(2)
    build_im2col(y)
    y = conv_gelu(3)

    # Single lane-dense store; no output read-modify-write.
    o_ref[...] = (ab_ref[0] * b1 + ab_ref[1] * y).astype(o_ref.dtype)


def _num_parallel_steps(batch):
    """Split the lane-fused batch across TensorCores (v7x) when possible."""
    n_cores = 1
    try:
        dev = jax.devices()[0]
        n = getattr(dev, "num_cores", None)
        if isinstance(n, int) and n > 0:
            n_cores = n
        elif "v7" in str(getattr(dev, "device_kind", "")).lower():
            n_cores = 2
    except Exception:
        n_cores = 1
    return max(1, math.gcd(batch, n_cores))


def mixblock_forward(x_nchw, w1, w2a, w2b, w2c, alpha, beta, num_steps=None):
    """x_nchw: (B, C, H, W) float32.  Conv weights: (3, 3, Cin, Cout) HWIO.

    Returns (B, C, H, W) float32.
    """
    x = x_nchw.astype(jnp.float32)
    B, C, H, W = x.shape
    HW = H * W
    Cp = ((C + 7) // 8) * 8                    # channels padded to sublane tile

    if num_steps is None:
        num_steps = _num_parallel_steps(B)
    num_steps = max(1, math.gcd(B, int(num_steps)))
    n_step = (B // num_steps) * HW             # lane width of one grid step

    # Lane-fused layout: x_flat[c, b*HW + p] = x[b, c, p]; pad channels to Cp.
    x_flat = jnp.transpose(x.reshape(B, C, HW), (1, 0, 2)).reshape(C, B * HW)
    x_flat = jnp.pad(x_flat, ((0, Cp - C), (0, 0)))

    def pack(w_hwio):
        # HWIO (ky,kx,ci,co) -> (co, ky*3+kx, ci), zero-padded -> (Cp, 9*Cp)
        w = jnp.transpose(w_hwio, (3, 0, 1, 2))
        w = jnp.pad(w, ((0, Cp - C), (0, 0), (0, 0), (0, Cp - C)))
        return w.reshape(Cp, 9 * Cp)

    w_all = jnp.stack([pack(w1), pack(w2a), pack(w2b), pack(w2c)], axis=0)

    # Per-tap validity masks (trace-time numpy constants, per-image position).
    pos = np.arange(n_step)
    pp = pos % HW
    hh, ww = pp // W, pp % W
    masks = np.stack(
        [((hh + dy >= 0) & (hh + dy < H) & (ww + dx >= 0) & (ww + dx < W))
         .astype(np.float32) for dy, dx in _TAP_OFFSETS], axis=0)
    masks = jnp.asarray(masks)[:, None, :]     # (9, 1, n_step)

    ab = jnp.array([alpha, beta], jnp.float32)

    kernel = functools.partial(mixblock_kernel, width=W, c_pad=Cp)
    out_flat = pl.pallas_call(
        kernel,
        out_shape=jax.ShapeDtypeStruct((Cp, B * HW), jnp.float32),
        grid_spec=pltpu.PrefetchScalarGridSpec(
            num_scalar_prefetch=1,
            grid=(num_steps,),
            in_specs=[
                pl.BlockSpec((Cp, n_step), lambda s, ab: (0, s)),
                pl.BlockSpec((4, Cp, 9 * Cp), lambda s, ab: (0, 0, 0)),
                pl.BlockSpec((9, 1, n_step), lambda s, ab: (0, 0, 0)),
            ],
            out_specs=pl.BlockSpec((Cp, n_step), lambda s, ab: (0, s)),
            scratch_shapes=[pltpu.VMEM((9 * Cp, n_step), jnp.float32)],
        ),
        compiler_params=pltpu.CompilerParams(
            dimension_semantics=("parallel",)),
    )(ab, x_flat, w_all, masks)

    out = out_flat[:C].reshape(C, B, HW)
    return jnp.transpose(out, (1, 0, 2)).reshape(B, C, H, W)


def mixblock_reference(x_nchw, w1, w2a, w2b, w2c, alpha, beta):
    """Pure-JAX reference (XLA conv + exact GELU)."""
    x = jnp.transpose(x_nchw, (0, 2, 3, 1))
    dn = ("NHWC", "HWIO", "NHWC")

    def conv_gelu(h, w):
        y = jax.lax.conv_general_dilated(h, w, (1, 1), "SAME",
                                         dimension_numbers=dn)
        return jax.nn.gelu(y, approximate=False)

    b1 = conv_gelu(x, w1)
    b2 = conv_gelu(conv_gelu(conv_gelu(x, w2a), w2b), w2c)
    out = alpha * b1 + beta * b2
    return jnp.transpose(out, (0, 3, 1, 2))


if __name__ == "__main__":
    # Small shapes consistent with the module: B=2, n_feats=4, 16x16 spatial.
    B, C, H, W = 2, 4, 16, 16

    key = jax.random.PRNGKey(0)
    kx, k1, k2a, k2b, k2c = jax.random.split(key, 5)

    x = jax.random.normal(kx, (B, C, H, W), dtype=jnp.float32)

    # Deterministic synthetic conv weights, stored in HWIO layout (PyTorch's
    # Conv2d stores OIHW; only the layout differs, init is synthetic).
    def mk_w(k):
        return 0.1 * jax.random.normal(k, (3, 3, C, C), dtype=jnp.float32)

    w1, w2a, w2b, w2c = mk_w(k1), mk_w(k2a), mk_w(k2b), mk_w(k2c)
    alpha, beta = 1.0, 1.0  # nn.Parameter(torch.ones(1)) each

    out = jax.block_until_ready(
        mixblock_forward(x, w1, w2a, w2b, w2c, alpha, beta))
    ref = jax.block_until_ready(
        mixblock_reference(x, w1, w2a, w2b, w2c, alpha, beta))

    assert out.shape == (B, C, H, W), out.shape
    max_err = float(jnp.max(jnp.abs(out - ref)))
    assert jnp.allclose(out, ref, atol=1e-3, rtol=1e-3), max_err

    print("KERNEL_OK")
</pallas_src>

<mosaic_0001>
module attributes {stable_mosaic.version = 11 : i64} {
  func.func @mixblock_kernel(%arg0: i32, %arg1: memref<2xf32, #tpu.memory_space<smem>>, %arg2: memref<8x512xf32, #tpu.memory_space<vmem>>, %arg3: memref<4x8x72xf32, #tpu.memory_space<vmem>>, %arg4: memref<9x1x512xf32, #tpu.memory_space<vmem>>, %arg5: memref<8x512xf32, #tpu.memory_space<vmem>>, %arg6: memref<72x512xf32, #tpu.memory_space<vmem>>) attributes {dimension_semantics = [#tpu.dimension_semantics<parallel>], iteration_bounds = array<i64: 1>, scalar_prefetch = 1 : i64, scratch_operands = 1 : i64, tpu.core_type = #tpu.core_type<tc>, window_params = [{transform_indices = @transform_0, window_bounds = array<i64: 8, 512>}, {pipeline_mode = #tpu.pipeline_mode<synchronous>, transform_indices = @transform_1, window_bounds = array<i64: 4, 8, 72>}, {pipeline_mode = #tpu.pipeline_mode<synchronous>, transform_indices = @transform_2, window_bounds = array<i64: 9, 1, 512>}, {transform_indices = @transform_3, window_bounds = array<i64: 8, 512>}]} {
    %c0 = arith.constant 0 : index
    %c0_0 = arith.constant 0 : index
    %0 = vector.load %arg2[%c0, %c0_0] : memref<8x512xf32, #tpu.memory_space<vmem>>, vector<8x512xf32>
    %c17_i32 = arith.constant 17 : i32
    %1 = tpu.dynamic_rotate %0 by %c17_i32 dim 1 : vector<8x512xf32>, i32 -> vector<8x512xf32>
    %c0_1 = arith.constant 0 : index
    %c0_2 = arith.constant 0 : index
    %c0_3 = arith.constant 0 : index
    %2 = vector.load %arg4[%c0_1, %c0_2, %c0_3] : memref<9x1x512xf32, #tpu.memory_space<vmem>>, vector<1x1x512xf32>
    %3 = vector.shape_cast %2 : vector<1x1x512xf32> to vector<1x512xf32>
    %4 = vector.broadcast %3 : vector<1x512xf32> to vector<8x512xf32>
    %5 = arith.mulf %1, %4 : vector<8x512xf32>
    %c0_4 = arith.constant 0 : index
    %c0_5 = arith.constant 0 : index
    %6 = vector.load %arg6[%c0_4, %c0_5] : memref<72x512xf32, #tpu.memory_space<vmem>>, vector<8x512xf32>
    tpu.vector_store %arg6[%c0_4, %c0_5], %5 {strides = array<i32>} : memref<72x512xf32, #tpu.memory_space<vmem>>, vector<8x512xf32>,
    %c16_i32 = arith.constant 16 : i32
    %7 = tpu.dynamic_rotate %0 by %c16_i32 dim 1 : vector<8x512xf32>, i32 -> vector<8x512xf32>
    %c1 = arith.constant 1 : index
    %c0_6 = arith.constant 0 : index
    %c0_7 = arith.constant 0 : index
    %8 = vector.load %arg4[%c1, %c0_6, %c0_7] : memref<9x1x512xf32, #tpu.memory_space<vmem>>, vector<1x1x512xf32>
    %9 = vector.shape_cast %8 : vector<1x1x512xf32> to vector<1x512xf32>
    %10 = vector.broadcast %9 : vector<1x512xf32> to vector<8x512xf32>
    %11 = arith.mulf %7, %10 : vector<8x512xf32>
    %c8 = arith.constant 8 : index
    %c0_8 = arith.constant 0 : index
    %12 = vector.load %arg6[%c8, %c0_8] : memref<72x512xf32, #tpu.memory_space<vmem>>, vector<8x512xf32>
    tpu.vector_store %arg6[%c8, %c0_8], %11 {strides = array<i32>} : memref<72x512xf32, #tpu.memory_space<vmem>>, vector<8x512xf32>,
    %c15_i32 = arith.constant 15 : i32
    %13 = tpu.dynamic_rotate %0 by %c15_i32 dim 1 : vector<8x512xf32>, i32 -> vector<8x512xf32>
    %c2 = arith.constant 2 : index
    %c0_9 = arith.constant 0 : index
    %c0_10 = arith.constant 0 : index
    %14 = vector.load %arg4[%c2, %c0_9, %c0_10] : memref<9x1x512xf32, #tpu.memory_space<vmem>>, vector<1x1x512xf32>
    %15 = vector.shape_cast %14 : vector<1x1x512xf32> to vector<1x512xf32>
    %16 = vector.broadcast %15 : vector<1x512xf32> to vector<8x512xf32>
    %17 = arith.mulf %13, %16 : vector<8x512xf32>
    %c16 = arith.constant 16 : index
    %c0_11 = arith.constant 0 : index
    %18 = vector.load %arg6[%c16, %c0_11] : memref<72x512xf32, #tpu.memory_space<vmem>>, vector<8x512xf32>
    tpu.vector_store %arg6[%c16, %c0_11], %17 {strides = array<i32>} : memref<72x512xf32, #tpu.memory_space<vmem>>, vector<8x512xf32>,
    %c1_i32 = arith.constant 1 : i32
    %19 = tpu.dynamic_rotate %0 by %c1_i32 dim 1 : vector<8x512xf32>, i32 -> vector<8x512xf32>
    %c3 = arith.constant 3 : index
    %c0_12 = arith.constant 0 : index
    %c0_13 = arith.constant 0 : index
    %20 = vector.load %arg4[%c3, %c0_12, %c0_13] : memref<9x1x512xf32, #tpu.memory_space<vmem>>, vector<1x1x512xf32>
    %21 = vector.shape_cast %20 : vector<1x1x512xf32> to vector<1x512xf32>
    %22 = vector.broadcast %21 : vector<1x512xf32> to vector<8x512xf32>
    %23 = arith.mulf %19, %22 : vector<8x512xf32>
    %c24 = arith.constant 24 : index
    %c0_14 = arith.constant 0 : index
    %24 = vector.load %arg6[%c24, %c0_14] : memref<72x512xf32, #tpu.memory_space<vmem>>, vector<8x512xf32>
    tpu.vector_store %arg6[%c24, %c0_14], %23 {strides = array<i32>} : memref<72x512xf32, #tpu.memory_space<vmem>>, vector<8x512xf32>,
    %c32 = arith.constant 32 : index
    %c0_15 = arith.constant 0 : index
    %25 = vector.load %arg6[%c32, %c0_15] : memref<72x512xf32, #tpu.memory_space<vmem>>, vector<8x512xf32>
    tpu.vector_store %arg6[%c32, %c0_15], %0 {strides = array<i32>} : memref<72x512xf32, #tpu.memory_space<vmem>>, vector<8x512xf32>,
    %c511_i32 = arith.constant 511 : i32
    %26 = tpu.dynamic_rotate %0 by %c511_i32 dim 1 : vector<8x512xf32>, i32 -> vector<8x512xf32>
    %c5 = arith.constant 5 : index
    %c0_16 = arith.constant 0 : index
    %c0_17 = arith.constant 0 : index
    %27 = vector.load %arg4[%c5, %c0_16, %c0_17] : memref<9x1x512xf32, #tpu.memory_space<vmem>>, vector<1x1x512xf32>
    %28 = vector.shape_cast %27 : vector<1x1x512xf32> to vector<1x512xf32>
    %29 = vector.broadcast %28 : vector<1x512xf32> to vector<8x512xf32>
    %30 = arith.mulf %26, %29 : vector<8x512xf32>
    %c40 = arith.constant 40 : index
    %c0_18 = arith.constant 0 : index
    %31 = vector.load %arg6[%c40, %c0_18] : memref<72x512xf32, #tpu.memory_space<vmem>>, vector<8x512xf32>
    tpu.vector_store %arg6[%c40, %c0_18], %30 {strides = array<i32>} : memref<72x512xf32, #tpu.memory_space<vmem>>, vector<8x512xf32>,
    %c497_i32 = arith.constant 497 : i32
    %32 = tpu.dynamic_rotate %0 by %c497_i32 dim 1 : vector<8x512xf32>, i32 -> vector<8x512xf32>
    %c6 = arith.constant 6 : index
    %c0_19 = arith.constant 0 : index
    %c0_20 = arith.constant 0 : index
    %33 = vector.load %arg4[%c6, %c0_19, %c0_20] : memref<9x1x512xf32, #tpu.memory_space<vmem>>, vector<1x1x512xf32>
    %34 = vector.shape_cast %33 : vector<1x1x512xf32> to vector<1x512xf32>
    %35 = vector.broadcast %34 : vector<1x512xf32> to vector<8x512xf32>
    %36 = arith.mulf %32, %35 : vector<8x512xf32>
    %c48 = arith.constant 48 : index
    %c0_21 = arith.constant 0 : index
    %37 = vector.load %arg6[%c48, %c0_21] : memref<72x512xf32, #tpu.memory_space<vmem>>, vector<8x512xf32>
    tpu.vector_store %arg6[%c48, %c0_21], %36 {strides = array<i32>} : memref<72x512xf32, #tpu.memory_space<vmem>>, vector<8x512xf32>,
    %c496_i32 = arith.constant 496 : i32
    %38 = tpu.dynamic_rotate %0 by %c496_i32 dim 1 : vector<8x512xf32>, i32 -> vector<8x512xf32>
    %c7 = arith.constant 7 : index
    %c0_22 = arith.constant 0 : index
    %c0_23 = arith.constant 0 : index
    %39 = vector.load %arg4[%c7, %c0_22, %c0_23] : memref<9x1x512xf32, #tpu.memory_space<vmem>>, vector<1x1x512xf32>
    %40 = vector.shape_cast %39 : vector<1x1x512xf32> to vector<1x512xf32>
    %41 = vector.broadcast %40 : vector<1x512xf32> to vector<8x512xf32>
    %42 = arith.mulf %38, %41 : vector<8x512xf32>
    %c56 = arith.constant 56 : index
    %c0_24 = arith.constant 0 : index
    %43 = vector.load %arg6[%c56, %c0_24] : memref<72x512xf32, #tpu.memory_space<vmem>>, vector<8x512xf32>
    tpu.vector_store %arg6[%c56, %c0_24], %42 {strides = array<i32>} : memref<72x512xf32, #tpu.memory_space<vmem>>, vector<8x512xf32>,
    %c495_i32 = arith.constant 495 : i32
    %44 = tpu.dynamic_rotate %0 by %c495_i32 dim 1 : vector<8x512xf32>, i32 -> vector<8x512xf32>
    %c8_25 = arith.constant 8 : index
    %c0_26 = arith.constant 0 : index
    %c0_27 = arith.constant 0 : index
    %45 = vector.load %arg4[%c8_25, %c0_26, %c0_27] : memref<9x1x512xf32, #tpu.memory_space<vmem>>, vector<1x1x512xf32>
    %46 = vector.shape_cast %45 : vector<1x1x512xf32> to vector<1x512xf32>
    %47 = vector.broadcast %46 : vector<1x512xf32> to vector<8x512xf32>
    %48 = arith.mulf %44, %47 : vector<8x512xf32>
    %c64 = arith.constant 64 : index
    %c0_28 = arith.constant 0 : index
    %49 = vector.load %arg6[%c64, %c0_28] : memref<72x512xf32, #tpu.memory_space<vmem>>, vector<8x512xf32>
    tpu.vector_store %arg6[%c64, %c0_28], %48 {strides = array<i32>} : memref<72x512xf32, #tpu.memory_space<vmem>>, vector<8x512xf32>,
    %c0_29 = arith.constant 0 : index
    %c0_30 = arith.constant 0 : index
    %c0_31 = arith.constant 0 : index
    %50 = vector.load %arg3[%c0_29, %c0_30, %c0_31] : memref<4x8x72xf32, #tpu.memory_space<vmem>>, vector<1x8x72xf32>
    %51 = vector.shape_cast %50 : vector<1x8x72xf32> to vector<8x72xf32>
    %c0_32 = arith.constant 0 : index
    %c0_33 = arith.constant 0 : index
    %52 = vector.load %arg6[%c0_32, %c0_33] : memref<72x512xf32, #tpu.memory_space<vmem>>, vector<72x512xf32>
    %cst = arith.constant dense<0.000000e+00> : vector<8x512xf32>
    %53 = tpu.matmul %51, %52, %cst {dimension_numbers = #tpu.dot_dimension_numbers<[1], [0], [0], [1], [0, 0, 1, 1], [], []>} : vector<8x72xf32>, vector<72x512xf32>, vector<8x512xf32> -> vector<8x512xf32>
    %cst_34 = arith.constant 5.000000e-01 : f32
    %54 = vector.broadcast %cst_34 : f32 to vector<8x512xf32>
    %55 = arith.mulf %54, %53 : vector<8x512xf32>
    %cst_35 = arith.constant 0.707106769 : f32
    %56 = vector.broadcast %cst_35 : f32 to vector<8x512xf32>
    %57 = arith.mulf %53, %56 : vector<8x512xf32>
    %58 = math.absf %57 : vector<8x512xf32>
    %cst_36 = arith.constant 0.327591091 : f32
    %59 = vector.broadcast %cst_36 : f32 to vector<8x512xf32>
    %60 = arith.mulf %59, %58 : vector<8x512xf32>
    %cst_37 = arith.constant 1.000000e+00 : f32
    %61 = vector.broadcast %cst_37 : f32 to vector<8x512xf32>
    %62 = arith.addf %61, %60 : vector<8x512xf32>
    %63 = tpu.reciprocal %62 {approx = true} : vector<8x512xf32> -> vector<8x512xf32>
    %64 = arith.mulf %62, %63 : vector<8x512xf32>
    %cst_38 = arith.constant 2.000000e+00 : f32
    %65 = vector.broadcast %cst_38 : f32 to vector<8x512xf32>
    %66 = arith.subf %65, %64 : vector<8x512xf32>
    %67 = arith.mulf %63, %66 : vector<8x512xf32>
    %cst_39 = arith.constant 1.06140542 : f32
    %68 = vector.broadcast %cst_39 : f32 to vector<8x512xf32>
    %69 = arith.mulf %67, %68 : vector<8x512xf32>
    %cst_40 = arith.constant -1.45315206 : f32
    %70 = vector.broadcast %cst_40 : f32 to vector<8x512xf32>
    %71 = arith.addf %70, %69 : vector<8x512xf32>
    %72 = arith.mulf %67, %71 : vector<8x512xf32>
    %cst_41 = arith.constant 1.42141378 : f32
    %73 = vector.broadcast %cst_41 : f32 to vector<8x512xf32>
    %74 = arith.addf %73, %72 : vector<8x512xf32>
    %75 = arith.mulf %67, %74 : vector<8x512xf32>
    %cst_42 = arith.constant -0.284496725 : f32
    %76 = vector.broadcast %cst_42 : f32 to vector<8x512xf32>
    %77 = arith.addf %76, %75 : vector<8x512xf32>
    %78 = arith.mulf %67, %77 : vector<8x512xf32>
    %cst_43 = arith.constant 0.254829586 : f32
    %79 = vector.broadcast %cst_43 : f32 to vector<8x512xf32>
    %80 = arith.addf %79, %78 : vector<8x512xf32>
    %81 = arith.mulf %67, %80 : vector<8x512xf32>
    %cst_44 = arith.constant 0.000000e+00 : f32
    %82 = vector.broadcast %cst_44 : f32 to vector<8x512xf32>
    %83 = arith.subf %82, %58 : vector<8x512xf32>
    %84 = arith.mulf %83, %58 : vector<8x512xf32>
    %85 = math.exp %84 : vector<8x512xf32>
    %86 = arith.mulf %81, %85 : vector<8x512xf32>
    %cst_45 = arith.constant 1.000000e+00 : f32
    %87 = vector.broadcast %cst_45 : f32 to vector<8x512xf32>
    %88 = arith.subf %87, %86 : vector<8x512xf32>
    %cst_46 = arith.constant 0.000000e+00 : f32
    %89 = vector.broadcast %cst_46 : f32 to vector<8x512xf32>
    %90 = arith.cmpf oge, %57, %89 : vector<8x512xf32>
    %cst_47 = arith.constant 0.000000e+00 : f32
    %91 = vector.broadcast %cst_47 : f32 to vector<8x512xf32>
    %92 = arith.subf %91, %88 : vector<8x512xf32>
    %93 = arith.select %90, %88, %92 : vector<8x512xi1>, vector<8x512xf32>
    %cst_48 = arith.constant 1.000000e+00 : f32
    %94 = vector.broadcast %cst_48 : f32 to vector<8x512xf32>
    %95 = arith.addf %94, %93 : vector<8x512xf32>
    %96 = arith.mulf %55, %95 : vector<8x512xf32>
    %c1_49 = arith.constant 1 : index
    %c0_50 = arith.constant 0 : index
    %c0_51 = arith.constant 0 : index
    %97 = vector.load %arg3[%c1_49, %c0_50, %c0_51] : memref<4x8x72xf32, #tpu.memory_space<vmem>>, vector<1x8x72xf32>
    %98 = vector.shape_cast %97 : vector<1x8x72xf32> to vector<8x72xf32>
    %c0_52 = arith.constant 0 : index
    %c0_53 = arith.constant 0 : index
    %99 = vector.load %arg6[%c0_52, %c0_53] : memref<72x512xf32, #tpu.memory_space<vmem>>, vector<72x512xf32>
    %cst_54 = arith.constant dense<0.000000e+00> : vector<8x512xf32>
    %100 = tpu.matmul %98, %99, %cst_54 {dimension_numbers = #tpu.dot_dimension_numbers<[1], [0], [0], [1], [0, 0, 1, 1], [], []>} : vector<8x72xf32>, vector<72x512xf32>, vector<8x512xf32> -> vector<8x512xf32>
    %cst_55 = arith.constant 5.000000e-01 : f32
    %101 = vector.broadcast %cst_55 : f32 to vector<8x512xf32>
    %102 = arith.mulf %101, %100 : vector<8x512xf32>
    %cst_56 = arith.constant 0.707106769 : f32
    %103 = vector.broadcast %cst_56 : f32 to vector<8x512xf32>
    %104 = arith.mulf %100, %103 : vector<8x512xf32>
    %105 = math.absf %104 : vector<8x512xf32>
    %cst_57 = arith.constant 0.327591091 : f32
    %106 = vector.broadcast %cst_57 : f32 to vector<8x512xf32>
    %107 = arith.mulf %106, %105 : vector<8x512xf32>
    %cst_58 = arith.constant 1.000000e+00 : f32
    %108 = vector.broadcast %cst_58 : f32 to vector<8x512xf32>
    %109 = arith.addf %108, %107 : vector<8x512xf32>
    %110 = tpu.reciprocal %109 {approx = true} : vector<8x512xf32> -> vector<8x512xf32>
    %111 = arith.mulf %109, %110 : vector<8x512xf32>
    %cst_59 = arith.constant 2.000000e+00 : f32
    %112 = vector.broadcast %cst_59 : f32 to vector<8x512xf32>
    %113 = arith.subf %112, %111 : vector<8x512xf32>
    %114 = arith.mulf %110, %113 : vector<8x512xf32>
    %cst_60 = arith.constant 1.06140542 : f32
    %115 = vector.broadcast %cst_60 : f32 to vector<8x512xf32>
    %116 = arith.mulf %114, %115 : vector<8x512xf32>
    %cst_61 = arith.constant -1.45315206 : f32
    %117 = vector.broadcast %cst_61 : f32 to vector<8x512xf32>
    %118 = arith.addf %117, %116 : vector<8x512xf32>
    %119 = arith.mulf %114, %118 : vector<8x512xf32>
    %cst_62 = arith.constant 1.42141378 : f32
    %120 = vector.broadcast %cst_62 : f32 to vector<8x512xf32>
    %121 = arith.addf %120, %119 : vector<8x512xf32>
    %122 = arith.mulf %114, %121 : vector<8x512xf32>
    %cst_63 = arith.constant -0.284496725 : f32
    %123 = vector.broadcast %cst_63 : f32 to vector<8x512xf32>
    %124 = arith.addf %123, %122 : vector<8x512xf32>
    %125 = arith.mulf %114, %124 : vector<8x512xf32>
    %cst_64 = arith.constant 0.254829586 : f32
    %126 = vector.broadcast %cst_64 : f32 to vector<8x512xf32>
    %127 = arith.addf %126, %125 : vector<8x512xf32>
    %128 = arith.mulf %114, %127 : vector<8x512xf32>
    %cst_65 = arith.constant 0.000000e+00 : f32
    %129 = vector.broadcast %cst_65 : f32 to vector<8x512xf32>
    %130 = arith.subf %129, %105 : vector<8x512xf32>
    %131 = arith.mulf %130, %105 : vector<8x512xf32>
    %132 = math.exp %131 : vector<8x512xf32>
    %133 = arith.mulf %128, %132 : vector<8x512xf32>
    %cst_66 = arith.constant 1.000000e+00 : f32
    %134 = vector.broadcast %cst_66 : f32 to vector<8x512xf32>
    %135 = arith.subf %134, %133 : vector<8x512xf32>
    %cst_67 = arith.constant 0.000000e+00 : f32
    %136 = vector.broadcast %cst_67 : f32 to vector<8x512xf32>
    %137 = arith.cmpf oge, %104, %136 : vector<8x512xf32>
    %cst_68 = arith.constant 0.000000e+00 : f32
    %138 = vector.broadcast %cst_68 : f32 to vector<8x512xf32>
    %139 = arith.subf %138, %135 : vector<8x512xf32>
    %140 = arith.select %137, %135, %139 : vector<8x512xi1>, vector<8x512xf32>
    %cst_69 = arith.constant 1.000000e+00 : f32
    %141 = vector.broadcast %cst_69 : f32 to vector<8x512xf32>
    %142 = arith.addf %141, %140 : vector<8x512xf32>
    %143 = arith.mulf %102, %142 : vector<8x512xf32>
    %c17_i32_70 = arith.constant 17 : i32
    %144 = tpu.dynamic_rotate %143 by %c17_i32_70 dim 1 : vector<8x512xf32>, i32 -> vector<8x512xf32>
    %c0_71 = arith.constant 0 : index
    %c0_72 = arith.constant 0 : index
    %c0_73 = arith.constant 0 : index
    %145 = vector.load %arg4[%c0_71, %c0_72, %c0_73] : memref<9x1x512xf32, #tpu.memory_space<vmem>>, vector<1x1x512xf32>
    %146 = vector.shape_cast %145 : vector<1x1x512xf32> to vector<1x512xf32>
    %147 = vector.broadcast %146 : vector<1x512xf32> to vector<8x512xf32>
    %148 = arith.mulf %144, %147 : vector<8x512xf32>
    %c0_74 = arith.constant 0 : index
    %c0_75 = arith.constant 0 : index
    %149 = vector.load %arg6[%c0_74, %c0_75] : memref<72x512xf32, #tpu.memory_space<vmem>>, vector<8x512xf32>
    tpu.vector_store %arg6[%c0_74, %c0_75], %148 {strides = array<i32>} : memref<72x512xf32, #tpu.memory_space<vmem>>, vector<8x512xf32>,
    %c16_i32_76 = arith.constant 16 : i32
    %150 = tpu.dynamic_rotate %143 by %c16_i32_76 dim 1 : vector<8x512xf32>, i32 -> vector<8x512xf32>
    %c1_77 = arith.constant 1 : index
    %c0_78 = arith.constant 0 : index
    %c0_79 = arith.constant 0 : index
    %151 = vector.load %arg4[%c1_77, %c0_78, %c0_79] : memref<9x1x512xf32, #tpu.memory_space<vmem>>, vector<1x1x512xf32>
    %152 = vector.shape_cast %151 : vector<1x1x512xf32> to vector<1x512xf32>
    %153 = vector.broadcast %152 : vector<1x512xf32> to vector<8x512xf32>
    %154 = arith.mulf %150, %153 : vector<8x512xf32>
    %c8_80 = arith.constant 8 : index
    %c0_81 = arith.constant 0 : index
    %155 = vector.load %arg6[%c8_80, %c0_81] : memref<72x512xf32, #tpu.memory_space<vmem>>, vector<8x512xf32>
    tpu.vector_store %arg6[%c8_80, %c0_81], %154 {strides = array<i32>} : memref<72x512xf32, #tpu.memory_space<vmem>>, vector<8x512xf32>,
    %c15_i32_82 = arith.constant 15 : i32
    %156 = tpu.dynamic_rotate %143 by %c15_i32_82 dim 1 : vector<8x512xf32>, i32 -> vector<8x512xf32>
    %c2_83 = arith.constant 2 : index
    %c0_84 = arith.constant 0 : index
    %c0_85 = arith.constant 0 : index
    %157 = vector.load %arg4[%c2_83, %c0_84, %c0_85] : memref<9x1x512xf32, #tpu.memory_space<vmem>>, vector<1x1x512xf32>
    %158 = vector.shape_cast %157 : vector<1x1x512xf32> to vector<1x512xf32>
    %159 = vector.broadcast %158 : vector<1x512xf32> to vector<8x512xf32>
    %160 = arith.mulf %156, %159 : vector<8x512xf32>
    %c16_86 = arith.constant 16 : index
    %c0_87 = arith.constant 0 : index
    %161 = vector.load %arg6[%c16_86, %c0_87] : memref<72x512xf32, #tpu.memory_space<vmem>>, vector<8x512xf32>
    tpu.vector_store %arg6[%c16_86, %c0_87], %160 {strides = array<i32>} : memref<72x512xf32, #tpu.memory_space<vmem>>, vector<8x512xf32>,
    %c1_i32_88 = arith.constant 1 : i32
    %162 = tpu.dynamic_rotate %143 by %c1_i32_88 dim 1 : vector<8x512xf32>, i32 -> vector<8x512xf32>
    %c3_89 = arith.constant 3 : index
    %c0_90 = arith.constant 0 : index
    %c0_91 = arith.constant 0 : index
    %163 = vector.load %arg4[%c3_89, %c0_90, %c0_91] : memref<9x1x512xf32, #tpu.memory_space<vmem>>, vector<1x1x512xf32>
    %164 = vector.shape_cast %163 : vector<1x1x512xf32> to vector<1x512xf32>
    %165 = vector.broadcast %164 : vector<1x512xf32> to vector<8x512xf32>
    %166 = arith.mulf %162, %165 : vector<8x512xf32>
    %c24_92 = arith.constant 24 : index
    %c0_93 = arith.constant 0 : index
    %167 = vector.load %arg6[%c24_92, %c0_93] : memref<72x512xf32, #tpu.memory_space<vmem>>, vector<8x512xf32>
    tpu.vector_store %arg6[%c24_92, %c0_93], %166 {strides = array<i32>} : memref<72x512xf32, #tpu.memory_space<vmem>>, vector<8x512xf32>,
    %c32_94 = arith.constant 32 : index
    %c0_95 = arith.constant 0 : index
    %168 = vector.load %arg6[%c32_94, %c0_95] : memref<72x512xf32, #tpu.memory_space<vmem>>, vector<8x512xf32>
    tpu.vector_store %arg6[%c32_94, %c0_95], %143 {strides = array<i32>} : memref<72x512xf32, #tpu.memory_space<vmem>>, vector<8x512xf32>,
    %c511_i32_96 = arith.constant 511 : i32
    %169 = tpu.dynamic_rotate %143 by %c511_i32_96 dim 1 : vector<8x512xf32>, i32 -> vector<8x512xf32>
    %c5_97 = arith.constant 5 : index
    %c0_98 = arith.constant 0 : index
    %c0_99 = arith.constant 0 : index
    %170 = vector.load %arg4[%c5_97, %c0_98, %c0_99] : memref<9x1x512xf32, #tpu.memory_space<vmem>>, vector<1x1x512xf32>
    %171 = vector.shape_cast %170 : vector<1x1x512xf32> to vector<1x512xf32>
    %172 = vector.broadcast %171 : vector<1x512xf32> to vector<8x512xf32>
    %173 = arith.mulf %169, %172 : vector<8x512xf32>
    %c40_100 = arith.constant 40 : index
    %c0_101 = arith.constant 0 : index
    %174 = vector.load %arg6[%c40_100, %c0_101] : memref<72x512xf32, #tpu.memory_space<vmem>>, vector<8x512xf32>
    tpu.vector_store %arg6[%c40_100, %c0_101], %173 {strides = array<i32>} : memref<72x512xf32, #tpu.memory_space<vmem>>, vector<8x512xf32>,
    %c497_i32_102 = arith.constant 497 : i32
    %175 = tpu.dynamic_rotate %143 by %c497_i32_102 dim 1 : vector<8x512xf32>, i32 -> vector<8x512xf32>
    %c6_103 = arith.constant 6 : index
    %c0_104 = arith.constant 0 : index
    %c0_105 = arith.constant 0 : index
    %176 = vector.load %arg4[%c6_103, %c0_104, %c0_105] : memref<9x1x512xf32, #tpu.memory_space<vmem>>, vector<1x1x512xf32>
    %177 = vector.shape_cast %176 : vector<1x1x512xf32> to vector<1x512xf32>
    %178 = vector.broadcast %177 : vector<1x512xf32> to vector<8x512xf32>
    %179 = arith.mulf %175, %178 : vector<8x512xf32>
    %c48_106 = arith.constant 48 : index
    %c0_107 = arith.constant 0 : index
    %180 = vector.load %arg6[%c48_106, %c0_107] : memref<72x512xf32, #tpu.memory_space<vmem>>, vector<8x512xf32>
    tpu.vector_store %arg6[%c48_106, %c0_107], %179 {strides = array<i32>} : memref<72x512xf32, #tpu.memory_space<vmem>>, vector<8x512xf32>,
    %c496_i32_108 = arith.constant 496 : i32
    %181 = tpu.dynamic_rotate %143 by %c496_i32_108 dim 1 : vector<8x512xf32>, i32 -> vector<8x512xf32>
    %c7_109 = arith.constant 7 : index
    %c0_110 = arith.constant 0 : index
    %c0_111 = arith.constant 0 : index
    %182 = vector.load %arg4[%c7_109, %c0_110, %c0_111] : memref<9x1x512xf32, #tpu.memory_space<vmem>>, vector<1x1x512xf32>
    %183 = vector.shape_cast %182 : vector<1x1x512xf32> to vector<1x512xf32>
    %184 = vector.broadcast %183 : vector<1x512xf32> to vector<8x512xf32>
    %185 = arith.mulf %181, %184 : vector<8x512xf32>
    %c56_112 = arith.constant 56 : index
    %c0_113 = arith.constant 0 : index
    %186 = vector.load %arg6[%c56_112, %c0_113] : memref<72x512xf32, #tpu.memory_space<vmem>>, vector<8x512xf32>
    tpu.vector_store %arg6[%c56_112, %c0_113], %185 {strides = array<i32>} : memref<72x512xf32, #tpu.memory_space<vmem>>, vector<8x512xf32>,
    %c495_i32_114 = arith.constant 495 : i32
    %187 = tpu.dynamic_rotate %143 by %c495_i32_114 dim 1 : vector<8x512xf32>, i32 -> vector<8x512xf32>
    %c8_115 = arith.constant 8 : index
    %c0_116 = arith.constant 0 : index
    %c0_117 = arith.constant 0 : index
    %188 = vector.load %arg4[%c8_115, %c0_116, %c0_117] : memref<9x1x512xf32, #tpu.memory_space<vmem>>, vector<1x1x512xf32>
    %189 = vector.shape_cast %188 : vector<1x1x512xf32> to vector<1x512xf32>
    %190 = vector.broadcast %189 : vector<1x512xf32> to vector<8x512xf32>
    %191 = arith.mulf %187, %190 : vector<8x512xf32>
    %c64_118 = arith.constant 64 : index
    %c0_119 = arith.constant 0 : index
    %192 = vector.load %arg6[%c64_118, %c0_119] : memref<72x512xf32, #tpu.memory_space<vmem>>, vector<8x512xf32>
    tpu.vector_store %arg6[%c64_118, %c0_119], %191 {strides = array<i32>} : memref<72x512xf32, #tpu.memory_space<vmem>>, vector<8x512xf32>,
    %c2_120 = arith.constant 2 : index
    %c0_121 = arith.constant 0 : index
    %c0_122 = arith.constant 0 : index
    %193 = vector.load %arg3[%c2_120, %c0_121, %c0_122] : memref<4x8x72xf32, #tpu.memory_space<vmem>>, vector<1x8x72xf32>
    %194 = vector.shape_cast %193 : vector<1x8x72xf32> to vector<8x72xf32>
    %c0_123 = arith.constant 0 : index
    %c0_124 = arith.constant 0 : index
    %195 = vector.load %arg6[%c0_123, %c0_124] : memref<72x512xf32, #tpu.memory_space<vmem>>, vector<72x512xf32>
    %cst_125 = arith.constant dense<0.000000e+00> : vector<8x512xf32>
    %196 = tpu.matmul %194, %195, %cst_125 {dimension_numbers = #tpu.dot_dimension_numbers<[1], [0], [0], [1], [0, 0, 1, 1], [], []>} : vector<8x72xf32>, vector<72x512xf32>, vector<8x512xf32> -> vector<8x512xf32>
    %cst_126 = arith.constant 5.000000e-01 : f32
    %197 = vector.broadcast %cst_126 : f32 to vector<8x512xf32>
    %198 = arith.mulf %197, %196 : vector<8x512xf32>
    %cst_127 = arith.constant 0.707106769 : f32
    %199 = vector.broadcast %cst_127 : f32 to vector<8x512xf32>
    %200 = arith.mulf %196, %199 : vector<8x512xf32>
    %201 = math.absf %200 : vector<8x512xf32>
    %cst_128 = arith.constant 0.327591091 : f32
    %202 = vector.broadcast %cst_128 : f32 to vector<8x512xf32>
    %203 = arith.mulf %202, %201 : vector<8x512xf32>
    %cst_129 = arith.constant 1.000000e+00 : f32
    %204 = vector.broadcast %cst_129 : f32 to vector<8x512xf32>
    %205 = arith.addf %204, %203 : vector<8x512xf32>
    %206 = tpu.reciprocal %205 {approx = true} : vector<8x512xf32> -> vector<8x512xf32>
    %207 = arith.mulf %205, %206 : vector<8x512xf32>
    %cst_130 = arith.constant 2.000000e+00 : f32
    %208 = vector.broadcast %cst_130 : f32 to vector<8x512xf32>
    %209 = arith.subf %208, %207 : vector<8x512xf32>
    %210 = arith.mulf %206, %209 : vector<8x512xf32>
    %cst_131 = arith.constant 1.06140542 : f32
    %211 = vector.broadcast %cst_131 : f32 to vector<8x512xf32>
    %212 = arith.mulf %210, %211 : vector<8x512xf32>
    %cst_132 = arith.constant -1.45315206 : f32
    %213 = vector.broadcast %cst_132 : f32 to vector<8x512xf32>
    %214 = arith.addf %213, %212 : vector<8x512xf32>
    %215 = arith.mulf %210, %214 : vector<8x512xf32>
    %cst_133 = arith.constant 1.42141378 : f32
    %216 = vector.broadcast %cst_133 : f32 to vector<8x512xf32>
    %217 = arith.addf %216, %215 : vector<8x512xf32>
    %218 = arith.mulf %210, %217 : vector<8x512xf32>
    %cst_134 = arith.constant -0.284496725 : f32
    %219 = vector.broadcast %cst_134 : f32 to vector<8x512xf32>
    %220 = arith.addf %219, %218 : vector<8x512xf32>
    %221 = arith.mulf %210, %220 : vector<8x512xf32>
    %cst_135 = arith.constant 0.254829586 : f32
    %222 = vector.broadcast %cst_135 : f32 to vector<8x512xf32>
    %223 = arith.addf %222, %221 : vector<8x512xf32>
    %224 = arith.mulf %210, %223 : vector<8x512xf32>
    %cst_136 = arith.constant 0.000000e+00 : f32
    %225 = vector.broadcast %cst_136 : f32 to vector<8x512xf32>
    %226 = arith.subf %225, %201 : vector<8x512xf32>
    %227 = arith.mulf %226, %201 : vector<8x512xf32>
    %228 = math.exp %227 : vector<8x512xf32>
    %229 = arith.mulf %224, %228 : vector<8x512xf32>
    %cst_137 = arith.constant 1.000000e+00 : f32
    %230 = vector.broadcast %cst_137 : f32 to vector<8x512xf32>
    %231 = arith.subf %230, %229 : vector<8x512xf32>
    %cst_138 = arith.constant 0.000000e+00 : f32
    %232 = vector.broadcast %cst_138 : f32 to vector<8x512xf32>
    %233 = arith.cmpf oge, %200, %232 : vector<8x512xf32>
    %cst_139 = arith.constant 0.000000e+00 : f32
    %234 = vector.broadcast %cst_139 : f32 to vector<8x512xf32>
    %235 = arith.subf %234, %231 : vector<8x512xf32>
    %236 = arith.select %233, %231, %235 : vector<8x512xi1>, vector<8x512xf32>
    %cst_140 = arith.constant 1.000000e+00 : f32
    %237 = vector.broadcast %cst_140 : f32 to vector<8x512xf32>
    %238 = arith.addf %237, %236 : vector<8x512xf32>
    %239 = arith.mulf %198, %238 : vector<8x512xf32>
    %c17_i32_141 = arith.constant 17 : i32
    %240 = tpu.dynamic_rotate %239 by %c17_i32_141 dim 1 : vector<8x512xf32>, i32 -> vector<8x512xf32>
    %c0_142 = arith.constant 0 : index
    %c0_143 = arith.constant 0 : index
    %c0_144 = arith.constant 0 : index
    %241 = vector.load %arg4[%c0_142, %c0_143, %c0_144] : memref<9x1x512xf32, #tpu.memory_space<vmem>>, vector<1x1x512xf32>
    %242 = vector.shape_cast %241 : vector<1x1x512xf32> to vector<1x512xf32>
    %243 = vector.broadcast %242 : vector<1x512xf32> to vector<8x512xf32>
    %244 = arith.mulf %240, %243 : vector<8x512xf32>
    %c0_145 = arith.constant 0 : index
    %c0_146 = arith.constant 0 : index
    %245 = vector.load %arg6[%c0_145, %c0_146] : memref<72x512xf32, #tpu.memory_space<vmem>>, vector<8x512xf32>
    tpu.vector_store %arg6[%c0_145, %c0_146], %244 {strides = array<i32>} : memref<72x512xf32, #tpu.memory_space<vmem>>, vector<8x512xf32>,
    %c16_i32_147 = arith.constant 16 : i32
    %246 = tpu.dynamic_rotate %239 by %c16_i32_147 dim 1 : vector<8x512xf32>, i32 -> vector<8x512xf32>
    %c1_148 = arith.constant 1 : index
    %c0_149 = arith.constant 0 : index
    %c0_150 = arith.constant 0 : index
    %247 = vector.load %arg4[%c1_148, %c0_149, %c0_150] : memref<9x1x512xf32, #tpu.memory_space<vmem>>, vector<1x1x512xf32>
    %248 = vector.shape_cast %247 : vector<1x1x512xf32> to vector<1x512xf32>
    %249 = vector.broadcast %248 : vector<1x512xf32> to vector<8x512xf32>
    %250 = arith.mulf %246, %249 : vector<8x512xf32>
    %c8_151 = arith.constant 8 : index
    %c0_152 = arith.constant 0 : index
    %251 = vector.load %arg6[%c8_151, %c0_152] : memref<72x512xf32, #tpu.memory_space<vmem>>, vector<8x512xf32>
    tpu.vector_store %arg6[%c8_151, %c0_152], %250 {strides = array<i32>} : memref<72x512xf32, #tpu.memory_space<vmem>>, vector<8x512xf32>,
    %c15_i32_153 = arith.constant 15 : i32
    %252 = tpu.dynamic_rotate %239 by %c15_i32_153 dim 1 : vector<8x512xf32>, i32 -> vector<8x512xf32>
    %c2_154 = arith.constant 2 : index
    %c0_155 = arith.constant 0 : index
    %c0_156 = arith.constant 0 : index
    %253 = vector.load %arg4[%c2_154, %c0_155, %c0_156] : memref<9x1x512xf32, #tpu.memory_space<vmem>>, vector<1x1x512xf32>
    %254 = vector.shape_cast %253 : vector<1x1x512xf32> to vector<1x512xf32>
    %255 = vector.broadcast %254 : vector<1x512xf32> to vector<8x512xf32>
    %256 = arith.mulf %252, %255 : vector<8x512xf32>
    %c16_157 = arith.constant 16 : index
    %c0_158 = arith.constant 0 : index
    %257 = vector.load %arg6[%c16_157, %c0_158] : memref<72x512xf32, #tpu.memory_space<vmem>>, vector<8x512xf32>
    tpu.vector_store %arg6[%c16_157, %c0_158], %256 {strides = array<i32>} : memref<72x512xf32, #tpu.memory_space<vmem>>, vector<8x512xf32>,
    %c1_i32_159 = arith.constant 1 : i32
    %258 = tpu.dynamic_rotate %239 by %c1_i32_159 dim 1 : vector<8x512xf32>, i32 -> vector<8x512xf32>
    %c3_160 = arith.constant 3 : index
    %c0_161 = arith.constant 0 : index
    %c0_162 = arith.constant 0 : index
    %259 = vector.load %arg4[%c3_160, %c0_161, %c0_162] : memref<9x1x512xf32, #tpu.memory_space<vmem>>, vector<1x1x512xf32>
    %260 = vector.shape_cast %259 : vector<1x1x512xf32> to vector<1x512xf32>
    %261 = vector.broadcast %260 : vector<1x512xf32> to vector<8x512xf32>
    %262 = arith.mulf %258, %261 : vector<8x512xf32>
    %c24_163 = arith.constant 24 : index
    %c0_164 = arith.constant 0 : index
    %263 = vector.load %arg6[%c24_163, %c0_164] : memref<72x512xf32, #tpu.memory_space<vmem>>, vector<8x512xf32>
    tpu.vector_store %arg6[%c24_163, %c0_164], %262 {strides = array<i32>} : memref<72x512xf32, #tpu.memory_space<vmem>>, vector<8x512xf32>,
    %c32_165 = arith.constant 32 : index
    %c0_166 = arith.constant 0 : index
    %264 = vector.load %arg6[%c32_165, %c0_166] : memref<72x512xf32, #tpu.memory_space<vmem>>, vector<8x512xf32>
    tpu.vector_store %arg6[%c32_165, %c0_166], %239 {strides = array<i32>} : memref<72x512xf32, #tpu.memory_space<vmem>>, vector<8x512xf32>,
    %c511_i32_167 = arith.constant 511 : i32
    %265 = tpu.dynamic_rotate %239 by %c511_i32_167 dim 1 : vector<8x512xf32>, i32 -> vector<8x512xf32>
    %c5_168 = arith.constant 5 : index
    %c0_169 = arith.constant 0 : index
    %c0_170 = arith.constant 0 : index
    %266 = vector.load %arg4[%c5_168, %c0_169, %c0_170] : memref<9x1x512xf32, #tpu.memory_space<vmem>>, vector<1x1x512xf32>
    %267 = vector.shape_cast %266 : vector<1x1x512xf32> to vector<1x512xf32>
    %268 = vector.broadcast %267 : vector<1x512xf32> to vector<8x512xf32>
    %269 = arith.mulf %265, %268 : vector<8x512xf32>
    %c40_171 = arith.constant 40 : index
    %c0_172 = arith.constant 0 : index
    %270 = vector.load %arg6[%c40_171, %c0_172] : memref<72x512xf32, #tpu.memory_space<vmem>>, vector<8x512xf32>
    tpu.vector_store %arg6[%c40_171, %c0_172], %269 {strides = array<i32>} : memref<72x512xf32, #tpu.memory_space<vmem>>, vector<8x512xf32>,
    %c497_i32_173 = arith.constant 497 : i32
    %271 = tpu.dynamic_rotate %239 by %c497_i32_173 dim 1 : vector<8x512xf32>, i32 -> vector<8x512xf32>
    %c6_174 = arith.constant 6 : index
    %c0_175 = arith.constant 0 : index
    %c0_176 = arith.constant 0 : index
    %272 = vector.load %arg4[%c6_174, %c0_175, %c0_176] : memref<9x1x512xf32, #tpu.memory_space<vmem>>, vector<1x1x512xf32>
    %273 = vector.shape_cast %272 : vector<1x1x512xf32> to vector<1x512xf32>
    %274 = vector.broadcast %273 : vector<1x512xf32> to vector<8x512xf32>
    %275 = arith.mulf %271, %274 : vector<8x512xf32>
    %c48_177 = arith.constant 48 : index
    %c0_178 = arith.constant 0 : index
    %276 = vector.load %arg6[%c48_177, %c0_178] : memref<72x512xf32, #tpu.memory_space<vmem>>, vector<8x512xf32>
    tpu.vector_store %arg6[%c48_177, %c0_178], %275 {strides = array<i32>} : memref<72x512xf32, #tpu.memory_space<vmem>>, vector<8x512xf32>,
    %c496_i32_179 = arith.constant 496 : i32
    %277 = tpu.dynamic_rotate %239 by %c496_i32_179 dim 1 : vector<8x512xf32>, i32 -> vector<8x512xf32>
    %c7_180 = arith.constant 7 : index
    %c0_181 = arith.constant 0 : index
    %c0_182 = arith.constant 0 : index
    %278 = vector.load %arg4[%c7_180, %c0_181, %c0_182] : memref<9x1x512xf32, #tpu.memory_space<vmem>>, vector<1x1x512xf32>
    %279 = vector.shape_cast %278 : vector<1x1x512xf32> to vector<1x512xf32>
    %280 = vector.broadcast %279 : vector<1x512xf32> to vector<8x512xf32>
    %281 = arith.mulf %277, %280 : vector<8x512xf32>
    %c56_183 = arith.constant 56 : index
    %c0_184 = arith.constant 0 : index
    %282 = vector.load %arg6[%c56_183, %c0_184] : memref<72x512xf32, #tpu.memory_space<vmem>>, vector<8x512xf32>
    tpu.vector_store %arg6[%c56_183, %c0_184], %281 {strides = array<i32>} : memref<72x512xf32, #tpu.memory_space<vmem>>, vector<8x512xf32>,
    %c495_i32_185 = arith.constant 495 : i32
    %283 = tpu.dynamic_rotate %239 by %c495_i32_185 dim 1 : vector<8x512xf32>, i32 -> vector<8x512xf32>
    %c8_186 = arith.constant 8 : index
    %c0_187 = arith.constant 0 : index
    %c0_188 = arith.constant 0 : index
    %284 = vector.load %arg4[%c8_186, %c0_187, %c0_188] : memref<9x1x512xf32, #tpu.memory_space<vmem>>, vector<1x1x512xf32>
    %285 = vector.shape_cast %284 : vector<1x1x512xf32> to vector<1x512xf32>
    %286 = vector.broadcast %285 : vector<1x512xf32> to vector<8x512xf32>
    %287 = arith.mulf %283, %286 : vector<8x512xf32>
    %c64_189 = arith.constant 64 : index
    %c0_190 = arith.constant 0 : index
    %288 = vector.load %arg6[%c64_189, %c0_190] : memref<72x512xf32, #tpu.memory_space<vmem>>, vector<8x512xf32>
    tpu.vector_store %arg6[%c64_189, %c0_190], %287 {strides = array<i32>} : memref<72x512xf32, #tpu.memory_space<vmem>>, vector<8x512xf32>,
    %c3_191 = arith.constant 3 : index
    %c0_192 = arith.constant 0 : index
    %c0_193 = arith.constant 0 : index
    %289 = vector.load %arg3[%c3_191, %c0_192, %c0_193] : memref<4x8x72xf32, #tpu.memory_space<vmem>>, vector<1x8x72xf32>
    %290 = vector.shape_cast %289 : vector<1x8x72xf32> to vector<8x72xf32>
    %c0_194 = arith.constant 0 : index
    %c0_195 = arith.constant 0 : index
    %291 = vector.load %arg6[%c0_194, %c0_195] : memref<72x512xf32, #tpu.memory_space<vmem>>, vector<72x512xf32>
    %cst_196 = arith.constant dense<0.000000e+00> : vector<8x512xf32>
    %292 = tpu.matmul %290, %291, %cst_196 {dimension_numbers = #tpu.dot_dimension_numbers<[1], [0], [0], [1], [0, 0, 1, 1], [], []>} : vector<8x72xf32>, vector<72x512xf32>, vector<8x512xf32> -> vector<8x512xf32>
    %cst_197 = arith.constant 5.000000e-01 : f32
    %293 = vector.broadcast %cst_197 : f32 to vector<8x512xf32>
    %294 = arith.mulf %293, %292 : vector<8x512xf32>
    %cst_198 = arith.constant 0.707106769 : f32
    %295 = vector.broadcast %cst_198 : f32 to vector<8x512xf32>
    %296 = arith.mulf %292, %295 : vector<8x512xf32>
    %297 = math.absf %296 : vector<8x512xf32>
    %cst_199 = arith.constant 0.327591091 : f32
    %298 = vector.broadcast %cst_199 : f32 to vector<8x512xf32>
    %299 = arith.mulf %298, %297 : vector<8x512xf32>
    %cst_200 = arith.constant 1.000000e+00 : f32
    %300 = vector.broadcast %cst_200 : f32 to vector<8x512xf32>
    %301 = arith.addf %300, %299 : vector<8x512xf32>
    %302 = tpu.reciprocal %301 {approx = true} : vector<8x512xf32> -> vector<8x512xf32>
    %303 = arith.mulf %301, %302 : vector<8x512xf32>
    %cst_201 = arith.constant 2.000000e+00 : f32
    %304 = vector.broadcast %cst_201 : f32 to vector<8x512xf32>
    %305 = arith.subf %304, %303 : vector<8x512xf32>
    %306 = arith.mulf %302, %305 : vector<8x512xf32>
    %cst_202 = arith.constant 1.06140542 : f32
    %307 = vector.broadcast %cst_202 : f32 to vector<8x512xf32>
    %308 = arith.mulf %306, %307 : vector<8x512xf32>
    %cst_203 = arith.constant -1.45315206 : f32
    %309 = vector.broadcast %cst_203 : f32 to vector<8x512xf32>
    %310 = arith.addf %309, %308 : vector<8x512xf32>
    %311 = arith.mulf %306, %310 : vector<8x512xf32>
    %cst_204 = arith.constant 1.42141378 : f32
    %312 = vector.broadcast %cst_204 : f32 to vector<8x512xf32>
    %313 = arith.addf %312, %311 : vector<8x512xf32>
    %314 = arith.mulf %306, %313 : vector<8x512xf32>
    %cst_205 = arith.constant -0.284496725 : f32
    %315 = vector.broadcast %cst_205 : f32 to vector<8x512xf32>
    %316 = arith.addf %315, %314 : vector<8x512xf32>
    %317 = arith.mulf %306, %316 : vector<8x512xf32>
    %cst_206 = arith.constant 0.254829586 : f32
    %318 = vector.broadcast %cst_206 : f32 to vector<8x512xf32>
    %319 = arith.addf %318, %317 : vector<8x512xf32>
    %320 = arith.mulf %306, %319 : vector<8x512xf32>
    %cst_207 = arith.constant 0.000000e+00 : f32
    %321 = vector.broadcast %cst_207 : f32 to vector<8x512xf32>
    %322 = arith.subf %321, %297 : vector<8x512xf32>
    %323 = arith.mulf %322, %297 : vector<8x512xf32>
    %324 = math.exp %323 : vector<8x512xf32>
    %325 = arith.mulf %320, %324 : vector<8x512xf32>
    %cst_208 = arith.constant 1.000000e+00 : f32
    %326 = vector.broadcast %cst_208 : f32 to vector<8x512xf32>
    %327 = arith.subf %326, %325 : vector<8x512xf32>
    %cst_209 = arith.constant 0.000000e+00 : f32
    %328 = vector.broadcast %cst_209 : f32 to vector<8x512xf32>
    %329 = arith.cmpf oge, %296, %328 : vector<8x512xf32>
    %cst_210 = arith.constant 0.000000e+00 : f32
    %330 = vector.broadcast %cst_210 : f32 to vector<8x512xf32>
    %331 = arith.subf %330, %327 : vector<8x512xf32>
    %332 = arith.select %329, %327, %331 : vector<8x512xi1>, vector<8x512xf32>
    %cst_211 = arith.constant 1.000000e+00 : f32
    %333 = vector.broadcast %cst_211 : f32 to vector<8x512xf32>
    %334 = arith.addf %333, %332 : vector<8x512xf32>
    %335 = arith.mulf %294, %334 : vector<8x512xf32>
    %c0_212 = arith.constant 0 : index
    %336 = memref.load %arg1[%c0_212] : memref<2xf32, #tpu.memory_space<smem>>
    %337 = vector.broadcast %336 : f32 to vector<8x512xf32>
    %338 = arith.mulf %337, %96 : vector<8x512xf32>
    %c1_213 = arith.constant 1 : index
    %339 = memref.load %arg1[%c1_213] : memref<2xf32, #tpu.memory_space<smem>>
    %340 = vector.broadcast %339 : f32 to vector<8x512xf32>
    %341 = arith.mulf %340, %335 : vector<8x512xf32>
    %342 = arith.addf %338, %341 : vector<8x512xf32>
    %c0_214 = arith.constant 0 : index
    %c0_215 = arith.constant 0 : index
    %343 = vector.load %arg5[%c0_214, %c0_215] : memref<8x512xf32, #tpu.memory_space<vmem>>, vector<8x512xf32>
    tpu.vector_store %arg5[%c0_214, %c0_215], %342 {strides = array<i32>} : memref<8x512xf32, #tpu.memory_space<vmem>>, vector<8x512xf32>,
    return
  }
  func.func @transform_0(%arg0: i32, %arg1: memref<2xf32, #tpu.memory_space<smem>>) -> (i32, i32) {
    %c0_i32 = arith.constant 0 : i32
    %c0_i32_0 = arith.constant 0 : i32
    return %c0_i32, %arg0 : i32, i32
  }
  func.func @transform_1(%arg0: i32, %arg1: memref<2xf32, #tpu.memory_space<smem>>) -> (i32, i32, i32) {
    %c0_i32 = arith.constant 0 : i32
    %c0_i32_0 = arith.constant 0 : i32
    %c0_i32_1 = arith.constant 0 : i32
    %c0_i32_2 = arith.constant 0 : i32
    return %c0_i32, %c0_i32_0, %c0_i32_1 : i32, i32, i32
  }
  func.func @transform_2(%arg0: i32, %arg1: memref<2xf32, #tpu.memory_space<smem>>) -> (i32, i32, i32) {
    %c0_i32 = arith.constant 0 : i32
    %c0_i32_0 = arith.constant 0 : i32
    %c0_i32_1 = arith.constant 0 : i32
    %c0_i32_2 = arith.constant 0 : i32
    return %c0_i32, %c0_i32_0, %c0_i32_1 : i32, i32, i32
  }
  func.func @transform_3(%arg0: i32, %arg1: memref<2xf32, #tpu.memory_space<smem>>) -> (i32, i32) {
    %c0_i32 = arith.constant 0 : i32
    %c0_i32_0 = arith.constant 0 : i32
    return %c0_i32, %arg0 : i32, i32
  }
}

</mosaic_0001>

<llo_original>
// kernel: tpu_custom_call.1
$region0: #{tpu_custom_call.1}
  #allocation0 [shape = 'u32[]', space=smem, size = 0x4, offset = 0x4, fixed_abs, tag = 'smem constant byte address 0x4 - core index']
  #allocation1 [shape = 'u32[144,128]{1,0:T(1,128)}', space=vmem, size = 0x12000, scoped, tag = 'internal scratch']
  #allocation2 [shape = 'f32[72,512]{1,0:T(8,128)}', space=vmem, size = 0x24000, scoped, tag = 'scratch operand']
  #allocation3 [shape = 's32[1]{0}', space=sflag, size = 0x4, scoped, tag = 'scoped memory for tpu_custom_call.1']
  #allocation4 [shape = 'u8[512]{0}', space=smem, size = 0x200, scoped, tag = 'prefetched SMEM operand 0']
  %s0 = inlined_call_operand.hbm [shape: f32[2], index: 0, kind: input, shape index: {}]
  %s1 = inlined_call_operand.hbm [shape: f32[8,512], index: 1, kind: input, shape index: {}]
  %s2 = inlined_call_operand.hbm [shape: f32[4,8,72], index: 2, kind: input, shape index: {}]
  %s3 = inlined_call_operand.hbm [shape: f32[9,1,512], index: 3, kind: input, shape index: {}]
  %s4 = inlined_call_operand.hbm [shape: f32[8,512], index: 4, kind: output, shape index: {}]
  %s5 = sld [smem:[#allocation0]]
  $region34: #{tpu_custom_call.1} parent=0
    _
  %s7 = ssub.s32 1, %s5
  %s8 = scalar_select 0, %s7, %s5
  %10 = dma.hbm_to_smem %s0, 16, [#allocation4], [#allocation3]
  %11 = dma.done [#allocation3], 16
  %12 = sfence
  $region1: #{tpu_custom_call.1} parent=0
    #allocation5 [shape = 'u8[16384]{0}', space=vmem, size = 0x4000, scoped, tag = 'input window, operand 1, single buffered']
    #allocation6 [shape = 's32[1]{0}', space=sflag, size = 0x4, scoped, tag = 'scoped memory for tpu_custom_call.1']
    #allocation7 [shape = 's32[1]{0}', space=sflag, size = 0x4, scoped, tag = 'scoped memory for tpu_custom_call.1']
    #allocation8 [shape = 'u8[16384]{0}', space=vmem, size = 0x4000, scoped, tag = 'input window, operand 2, single buffered']
    #allocation9 [shape = 's32[1]{0}', space=sflag, size = 0x4, scoped, tag = 'scoped memory for tpu_custom_call.1']
    #allocation10 [shape = 'u8[18432]{0}', space=vmem, size = 0x4800, scoped, tag = 'input window, operand 3, single buffered']
    #allocation11 [shape = 'u8[16384]{0}', space=vmem, size = 0x4000, scoped, tag = 'output window, operand 0, single buffered']
    %13 = vsyncpa [#allocation6], 0
    %14 = vsyncpa [#allocation9], 0
    %15 = vsyncpa [#allocation7], 0
    // Predicated region
    $region2: #{tpu_custom_call.1} parent=1 // pred_check
      _
    $region3: #{tpu_custom_call.1} parent=1 // pred_check_branch
      %17 = sbr.rel (0) target = $region5
    $region4: #{tpu_custom_call.1} parent=1 // pred_region
      %s19 = ssub.s32 512, 512
      %20 = vsyncadd [#allocation6], %s19
      %s22 = sshll.u32 [#allocation5], 4
      %s23 = int_to_ptr.vmem [resolvable:$true] %s22
      %25 = dma.hbm_to_vmem [thread:$0]  %s1, 512, %s23, [#allocation6]
    $region5: #{tpu_custom_call.1} parent=1 // pred_fallthru
      _
    // Predicated region
    $region6: #{tpu_custom_call.1} parent=1 // pred_check
      _
    $region7: #{tpu_custom_call.1} parent=1 // pred_check_branch
      %27 = sbr.rel (0) target = $region9
    $region8: #{tpu_custom_call.1} parent=1 // pred_region
      %s29 = ssub.s32 512, 512
      %30 = vsyncadd [#allocation9], %s29
      %s31 = sshll.u32 [#allocation8], 4
      %s32 = int_to_ptr.vmem [resolvable:$true] %s31
      %37 = dma.hbm_to_vmem [thread:$0]  %s2, 512, %s32, [#allocation9], 128, 128, 8
    $region9: #{tpu_custom_call.1} parent=1 // pred_fallthru
      _
    // Predicated region
    $region10: #{tpu_custom_call.1} parent=1 // pred_check
      _
    $region11: #{tpu_custom_call.1} parent=1 // pred_check_branch
      %39 = sbr.rel (0) target = $region13
    $region12: #{tpu_custom_call.1} parent=1 // pred_region
      %s41 = ssub.s32 576, 576
      %42 = vsyncadd [#allocation9], %s41
      %s43 = sshll.u32 [#allocation10], 4
      %s44 = int_to_ptr.vmem [resolvable:$true] %s43
      %49 = dma.hbm_to_vmem [thread:$0]  %s3, 576, %s44, [#allocation9], 64, 64, 4
    $region13: #{tpu_custom_call.1} parent=1 // pred_fallthru
      _
    // Predicated region
    $region14: #{tpu_custom_call.1} parent=1 // pred_check
      _
    $region15: #{tpu_custom_call.1} parent=1 // pred_check_branch
      %51 = sbr.rel (0) target = $region17
    $region16: #{tpu_custom_call.1} parent=1 // pred_region
      %52 = dma.done [#allocation6], 512
    $region17: #{tpu_custom_call.1} parent=1 // pred_fallthru
      _
    // Predicated region
    $region18: #{tpu_custom_call.1} parent=1 // pred_check
      _
    $region19: #{tpu_custom_call.1} parent=1 // pred_check_branch
      %54 = sbr.rel (0) target = $region21
    $region20: #{tpu_custom_call.1} parent=1 // pred_region
      %55 = dma.done [#allocation9], 512
    $region21: #{tpu_custom_call.1} parent=1 // pred_fallthru
      _
    // Predicated region
    $region22: #{tpu_custom_call.1} parent=1 // pred_check
      _
    $region23: #{tpu_custom_call.1} parent=1 // pred_check_branch
      %57 = sbr.rel (0) target = $region25
    $region24: #{tpu_custom_call.1} parent=1 // pred_region
      %58 = dma.done [#allocation9], 576
    $region25: #{tpu_custom_call.1} parent=1 // pred_fallthru
      _
    %v59 = vld [vmem:[#allocation5] sm:$0xff]
    %v60 = vld [vmem:[#allocation5 + $0x8] sm:$0xff]
    %v61 = vld [vmem:[#allocation5 + $0x10] sm:$0xff]
    %v62 = vld [vmem:[#allocation5 + $0x18] sm:$0xff]
    %63 = vrot.lane.b32.xlu0 %v59, 17
    %v64 = vpop.permute.xlu0 %63
    %65 = vrot.lane.b32.xlu0 %v60, 17
    %v66 = vpop.permute.xlu0 %65
    %67 = vrot.lane.b32.xlu0 %v61, 17
    %v68 = vpop.permute.xlu0 %67
    %69 = vrot.lane.b32.xlu0 %v62, 17
    %v70 = vpop.permute.xlu0 %69
    %v71 = vlaneseq
    %v72 = vand.u32 %v71, 127
    %vm73 = vcmp.lt.s32.totalorder %v72, 17
    %v74 = vsel %vm73, %v68, %v70
    %v75 = vsel %vm73, %v66, %v68
    %v76 = vsel %vm73, %v64, %v66
    %v77 = vsel %vm73, %v70, %v64
    %v78 = vld [vmem:[#allocation10] sm:$0xf]
    %v80 = vlaneseq
    %v81 = vshrl.u32 %v80, 7
    %v82 = vsub.s32 0, %v81
    %v83 = vrot.slane %v78, %v82
    %v84 = vlaneseq
    %v85 = vshrl.u32 %v84, 7
    %v86 = vsub.s32 1, %v85
    %v87 = vrot.slane %v78, %v86
    %v88 = vlaneseq
    %v89 = vshrl.u32 %v88, 7
    %v90 = vsub.s32 2, %v89
    %v91 = vrot.slane %v78, %v90
    %v92 = vlaneseq
    %v93 = vshrl.u32 %v92, 7
    %v94 = vsub.s32 3, %v93
    %v95 = vrot.slane %v78, %v94
    %v100 = vmul.f32 %v77, %v83
    %v101 = vmul.f32 %v76, %v87
    %v102 = vmul.f32 %v75, %v91
    %v103 = vmul.f32 %v74, %v95
    %104 = vst [vmem:[#allocation2] sm:$0xff] %v100
    %105 = vst [vmem:[#allocation2 + $0x8] sm:$0xff] %v101
    %106 = vst [vmem:[#allocation2 + $0x10] sm:$0xff] %v102
    %107 = vst [vmem:[#allocation2 + $0x18] sm:$0xff] %v103
    %108 = vrot.lane.b32.xlu0 %v59, 16
    %v109 = vpop.permute.xlu0 %108
    %110 = vrot.lane.b32.xlu0 %v60, 16
    %v111 = vpop.permute.xlu0 %110
    %112 = vrot.lane.b32.xlu0 %v61, 16
    %v113 = vpop.permute.xlu0 %112
    %114 = vrot.lane.b32.xlu0 %v62, 16
    %v115 = vpop.permute.xlu0 %114
    %vm116 = vcmp.lt.s32.totalorder %v72, 16
    %v117 = vsel %vm116, %v113, %v115
    %v118 = vsel %vm116, %v111, %v113
    %v119 = vsel %vm116, %v109, %v111
    %v120 = vsel %vm116, %v115, %v109
    %s121 = scalar_lea.vmem [#allocation10], 4
    %v122 = vld [vmem:[%s121] sm:$0xf]
    %v124 = vlaneseq
    %v125 = vshrl.u32 %v124, 7
    %v126 = vsub.s32 0, %v125
    %v127 = vrot.slane %v122, %v126
    %v128 = vlaneseq
    %v129 = vshrl.u32 %v128, 7
    %v130 = vsub.s32 1, %v129
    %v131 = vrot.slane %v122, %v130
    %v132 = vlaneseq
    %v133 = vshrl.u32 %v132, 7
    %v134 = vsub.s32 2, %v133
    %v135 = vrot.slane %v122, %v134
    %v136 = vlaneseq
    %v137 = vshrl.u32 %v136, 7
    %v138 = vsub.s32 3, %v137
    %v139 = vrot.slane %v122, %v138
    %v144 = vmul.f32 %v120, %v127
    %v145 = vmul.f32 %v119, %v131
    %v146 = vmul.f32 %v118, %v135
    %v147 = vmul.f32 %v117, %v139
    %148 = vst [vmem:[#allocation2 + $0x20] sm:$0xff] %v144
    %149 = vst [vmem:[#allocation2 + $0x28] sm:$0xff] %v145
    %150 = vst [vmem:[#allocation2 + $0x30] sm:$0xff] %v146
    %151 = vst [vmem:[#allocation2 + $0x38] sm:$0xff] %v147
    %152 = vrot.lane.b32.xlu0 %v59, 15
    %v153 = vpop.permute.xlu0 %152
    %154 = vrot.lane.b32.xlu0 %v60, 15
    %v155 = vpop.permute.xlu0 %154
    %156 = vrot.lane.b32.xlu0 %v61, 15
    %v157 = vpop.permute.xlu0 %156
    %158 = vrot.lane.b32.xlu0 %v62, 15
    %v159 = vpop.permute.xlu0 %158
    %vm160 = vcmp.lt.s32.totalorder %v72, 15
    %v161 = vsel %vm160, %v157, %v159
    %v162 = vsel %vm160, %v155, %v157
    %v163 = vsel %vm160, %v153, %v155
    %v164 = vsel %vm160, %v159, %v153
    %s165 = scalar_lea.vmem [#allocation10], 8
    %v166 = vld [vmem:[%s165] sm:$0xf]
    %v168 = vlaneseq
    %v169 = vshrl.u32 %v168, 7
    %v170 = vsub.s32 0, %v169
    %v171 = vrot.slane %v166, %v170
    %v172 = vlaneseq
    %v173 = vshrl.u32 %v172, 7
    %v174 = vsub.s32 1, %v173
    %v175 = vrot.slane %v166, %v174
    %v176 = vlaneseq
    %v177 = vshrl.u32 %v176, 7
    %v178 = vsub.s32 2, %v177
    %v179 = vrot.slane %v166, %v178
    %v180 = vlaneseq
    %v181 = vshrl.u32 %v180, 7
    %v182 = vsub.s32 3, %v181
    %v183 = vrot.slane %v166, %v182
    %v188 = vmul.f32 %v164, %v171
    %v189 = vmul.f32 %v163, %v175
    %v190 = vmul.f32 %v162, %v179
    %v191 = vmul.f32 %v161, %v183
    %192 = vst [vmem:[#allocation2 + $0x40] sm:$0xff] %v188
    %193 = vst [vmem:[#allocation2 + $0x48] sm:$0xff] %v189
    %194 = vst [vmem:[#allocation2 + $0x50] sm:$0xff] %v190
    %195 = vst [vmem:[#allocation2 + $0x58] sm:$0xff] %v191
    %196 = vrot.lane.b32.xlu0 %v59, 1
    %v197 = vpop.permute.xlu0 %196
    %198 = vrot.lane.b32.xlu0 %v60, 1
    %v199 = vpop.permute.xlu0 %198
    %200 = vrot.lane.b32.xlu0 %v61, 1
    %v201 = vpop.permute.xlu0 %200
    %202 = vrot.lane.b32.xlu0 %v62, 1
    %v203 = vpop.permute.xlu0 %202
    %vm204 = vcmp.lt.s32.totalorder %v72, 1
    %v205 = vsel %vm204, %v201, %v203
    %v206 = vsel %vm204, %v199, %v201
    %v207 = vsel %vm204, %v197, %v199
    %v208 = vsel %vm204, %v203, %v197
    %s209 = scalar_lea.vmem [#allocation10], 12
    %v210 = vld [vmem:[%s209] sm:$0xf]
    %v212 = vlaneseq
    %v213 = vshrl.u32 %v212, 7
    %v214 = vsub.s32 0, %v213
    %v215 = vrot.slane %v210, %v214
    %v216 = vlaneseq
    %v217 = vshrl.u32 %v216, 7
    %v218 = vsub.s32 1, %v217
    %v219 = vrot.slane %v210, %v218
    %v220 = vlaneseq
    %v221 = vshrl.u32 %v220, 7
    %v222 = vsub.s32 2, %v221
    %v223 = vrot.slane %v210, %v222
    %v224 = vlaneseq
    %v225 = vshrl.u32 %v224, 7
    %v226 = vsub.s32 3, %v225
    %v227 = vrot.slane %v210, %v226
    %v232 = vmul.f32 %v208, %v215
    %v233 = vmul.f32 %v207, %v219
    %v234 = vmul.f32 %v206, %v223
    %v235 = vmul.f32 %v205, %v227
    %236 = vst [vmem:[#allocation2 + $0x60] sm:$0xff] %v232
    %237 = vst [vmem:[#allocation2 + $0x68] sm:$0xff] %v233
    %238 = vst [vmem:[#allocation2 + $0x70] sm:$0xff] %v234
    %239 = vst [vmem:[#allocation2 + $0x78] sm:$0xff] %v235
    %240 = vst [vmem:[#allocation2 + $0x80] sm:$0xff] %v59
    %241 = vst [vmem:[#allocation2 + $0x88] sm:$0xff] %v60
    %242 = vst [vmem:[#allocation2 + $0x90] sm:$0xff] %v61
    %243 = vst [vmem:[#allocation2 + $0x98] sm:$0xff] %v62
    %244 = vrot.lane.b32.xlu0 %v59, 127
    %v245 = vpop.permute.xlu0 %244
    %246 = vrot.lane.b32.xlu0 %v60, 127
    %v247 = vpop.permute.xlu0 %246
    %248 = vrot.lane.b32.xlu0 %v61, 127
    %v249 = vpop.permute.xlu0 %248
    %250 = vrot.lane.b32.xlu0 %v62, 127
    %v251 = vpop.permute.xlu0 %250
    %vm252 = vcmp.lt.s32.totalorder %v72, 127
    %v253 = vsel %vm252, %v249, %v251
    %v254 = vsel %vm252, %v247, %v249
    %v255 = vsel %vm252, %v245, %v247
    %v256 = vsel %vm252, %v251, %v245
    %s257 = scalar_lea.vmem [#allocation10], 20
    %v258 = vld [vmem:[%s257] sm:$0xf]
    %v260 = vlaneseq
    %v261 = vshrl.u32 %v260, 7
    %v262 = vsub.s32 0, %v261
    %v263 = vrot.slane %v258, %v262
    %v264 = vlaneseq
    %v265 = vshrl.u32 %v264, 7
    %v266 = vsub.s32 1, %v265
    %v267 = vrot.slane %v258, %v266
    %v268 = vlaneseq
    %v269 = vshrl.u32 %v268, 7
    %v270 = vsub.s32 2, %v269
    %v271 = vrot.slane %v258, %v270
    %v272 = vlaneseq
    %v273 = vshrl.u32 %v272, 7
    %v274 = vsub.s32 3, %v273
    %v275 = vrot.slane %v258, %v274
    %v280 = vmul.f32 %v255, %v263
    %v281 = vmul.f32 %v254, %v267
    %v282 = vmul.f32 %v253, %v271
    %v283 = vmul.f32 %v256, %v275
    %284 = vst [vmem:[#allocation2 + $0xa0] sm:$0xff] %v280
    %285 = vst [vmem:[#allocation2 + $0xa8] sm:$0xff] %v281
    %286 = vst [vmem:[#allocation2 + $0xb0] sm:$0xff] %v282
    %287 = vst [vmem:[#allocation2 + $0xb8] sm:$0xff] %v283
    %288 = vrot.lane.b32.xlu0 %v59, 113
    %v289 = vpop.permute.xlu0 %288
    %290 = vrot.lane.b32.xlu0 %v60, 113
    %v291 = vpop.permute.xlu0 %290
    %292 = vrot.lane.b32.xlu0 %v61, 113
    %v293 = vpop.permute.xlu0 %292
    %294 = vrot.lane.b32.xlu0 %v62, 113
    %v295 = vpop.permute.xlu0 %294
    %vm296 = vcmp.lt.s32.totalorder %v72, 113
    %v297 = vsel %vm296, %v293, %v295
    %v298 = vsel %vm296, %v291, %v293
    %v299 = vsel %vm296, %v289, %v291
    %v300 = vsel %vm296, %v295, %v289
    %s301 = scalar_lea.vmem [#allocation10], 24
    %v302 = vld [vmem:[%s301] sm:$0xf]
    %v304 = vlaneseq
    %v305 = vshrl.u32 %v304, 7
    %v306 = vsub.s32 0, %v305
    %v307 = vrot.slane %v302, %v306
    %v308 = vlaneseq
    %v309 = vshrl.u32 %v308, 7
    %v310 = vsub.s32 1, %v309
    %v311 = vrot.slane %v302, %v310
    %v312 = vlaneseq
    %v313 = vshrl.u32 %v312, 7
    %v314 = vsub.s32 2, %v313
    %v315 = vrot.slane %v302, %v314
    %v316 = vlaneseq
    %v317 = vshrl.u32 %v316, 7
    %v318 = vsub.s32 3, %v317
    %v319 = vrot.slane %v302, %v318
    %v324 = vmul.f32 %v299, %v307
    %v325 = vmul.f32 %v298, %v311
    %v326 = vmul.f32 %v297, %v315
    %v327 = vmul.f32 %v300, %v319
    %328 = vst [vmem:[#allocation2 + $0xc0] sm:$0xff] %v324
    %329 = vst [vmem:[#allocation2 + $0xc8] sm:$0xff] %v325
    %330 = vst [vmem:[#allocation2 + $0xd0] sm:$0xff] %v326
    %331 = vst [vmem:[#allocation2 + $0xd8] sm:$0xff] %v327
    %332 = vrot.lane.b32.xlu0 %v59, 112
    %v333 = vpop.permute.xlu0 %332
    %334 = vrot.lane.b32.xlu0 %v60, 112
    %v335 = vpop.permute.xlu0 %334
    %336 = vrot.lane.b32.xlu0 %v61, 112
    %v337 = vpop.permute.xlu0 %336
    %338 = vrot.lane.b32.xlu0 %v62, 112
    %v339 = vpop.permute.xlu0 %338
    %vm340 = vcmp.lt.s32.totalorder %v72, 112
    %v341 = vsel %vm340, %v337, %v339
    %v342 = vsel %vm340, %v335, %v337
    %v343 = vsel %vm340, %v333, %v335
    %v344 = vsel %vm340, %v339, %v333
    %s345 = scalar_lea.vmem [#allocation10], 28
    %v346 = vld [vmem:[%s345] sm:$0xf]
    %v348 = vlaneseq
    %v349 = vshrl.u32 %v348, 7
    %v350 = vsub.s32 0, %v349
    %v351 = vrot.slane %v346, %v350
    %v352 = vlaneseq
    %v353 = vshrl.u32 %v352, 7
    %v354 = vsub.s32 1, %v353
    %v355 = vrot.slane %v346, %v354
    %v356 = vlaneseq
    %v357 = vshrl.u32 %v356, 7
    %v358 = vsub.s32 2, %v357
    %v359 = vrot.slane %v346, %v358
    %v360 = vlaneseq
    %v361 = vshrl.u32 %v360, 7
    %v362 = vsub.s32 3, %v361
    %v363 = vrot.slane %v346, %v362
    %v368 = vmul.f32 %v343, %v351
    %v369 = vmul.f32 %v342, %v355
    %v370 = vmul.f32 %v341, %v359
    %v371 = vmul.f32 %v344, %v363
    %372 = vst [vmem:[#allocation2 + $0xe0] sm:$0xff] %v368
    %373 = vst [vmem:[#allocation2 + $0xe8] sm:$0xff] %v369
    %374 = vst [vmem:[#allocation2 + $0xf0] sm:$0xff] %v370
    %375 = vst [vmem:[#allocation2 + $0xf8] sm:$0xff] %v371
    %376 = vrot.lane.b32.xlu0 %v59, 111
    %v377 = vpop.permute.xlu0 %376
    %378 = vrot.lane.b32.xlu0 %v60, 111
    %v379 = vpop.permute.xlu0 %378
    %380 = vrot.lane.b32.xlu0 %v61, 111
    %v381 = vpop.permute.xlu0 %380
    %382 = vrot.lane.b32.xlu0 %v62, 111
    %v383 = vpop.permute.xlu0 %382
    %vm384 = vcmp.lt.s32.totalorder %v72, 111
    %v385 = vsel %vm384, %v381, %v383
    %v386 = vsel %vm384, %v379, %v381
    %v387 = vsel %vm384, %v377, %v379
    %v388 = vsel %vm384, %v383, %v377
    %s389 = scalar_lea.vmem [#allocation10], 32
    %v390 = vld [vmem:[%s389] sm:$0xf]
    %v392 = vlaneseq
    %v393 = vshrl.u32 %v392, 7
    %v394 = vsub.s32 0, %v393
    %v395 = vrot.slane %v390, %v394
    %v396 = vlaneseq
    %v397 = vshrl.u32 %v396, 7
    %v398 = vsub.s32 1, %v397
    %v399 = vrot.slane %v390, %v398
    %v400 = vlaneseq
    %v401 = vshrl.u32 %v400, 7
    %v402 = vsub.s32 2, %v401
    %v403 = vrot.slane %v390, %v402
    %v404 = vlaneseq
    %v405 = vshrl.u32 %v404, 7
    %v406 = vsub.s32 3, %v405
    %v407 = vrot.slane %v390, %v406
    %v412 = vmul.f32 %v387, %v395
    %v413 = vmul.f32 %v386, %v399
    %v414 = vmul.f32 %v385, %v403
    %v415 = vmul.f32 %v388, %v407
    %416 = vst [vmem:[#allocation2 + $0x100] sm:$0xff] %v412
    %417 = vst [vmem:[#allocation2 + $0x108] sm:$0xff] %v413
    %418 = vst [vmem:[#allocation2 + $0x110] sm:$0xff] %v414
    %419 = vst [vmem:[#allocation2 + $0x118] sm:$0xff] %v415
    %v420 = vld [vmem:[#allocation8] sm:$0xff]
    %v421 = vld [vmem:[#allocation2] sm:$0xff]
    %v422 = vld [vmem:[#allocation2 + $0x8] sm:$0xff]
    %v423 = vld [vmem:[#allocation2 + $0x10] sm:$0xff]
    %v424 = vld [vmem:[#allocation2 + $0x18] sm:$0xff]
    %v425 = vld [vmem:[#allocation2 + $0x20] sm:$0xff]
    %v426 = vld [vmem:[#allocation2 + $0x28] sm:$0xff]
    %v427 = vld [vmem:[#allocation2 + $0x30] sm:$0xff]
    %v428 = vld [vmem:[#allocation2 + $0x38] sm:$0xff]
    %v429 = vld [vmem:[#allocation2 + $0x40] sm:$0xff]
    %v430 = vld [vmem:[#allocation2 + $0x48] sm:$0xff]
    %v431 = vld [vmem:[#allocation2 + $0x50] sm:$0xff]
    %v432 = vld [vmem:[#allocation2 + $0x58] sm:$0xff]
    %v433 = vld [vmem:[#allocation2 + $0x60] sm:$0xff]
    %v434 = vld [vmem:[#allocation2 + $0x68] sm:$0xff]
    %v435 = vld [vmem:[#allocation2 + $0x70] sm:$0xff]
    %v436 = vld [vmem:[#allocation2 + $0x78] sm:$0xff]
    %v437 = vld [vmem:[#allocation2 + $0x80] sm:$0xff]
    %v438 = vld [vmem:[#allocation2 + $0x88] sm:$0xff]
    %v439 = vld [vmem:[#allocation2 + $0x90] sm:$0xff]
    %v440 = vld [vmem:[#allocation2 + $0x98] sm:$0xff]
    %v441 = vld [vmem:[#allocation2 + $0xa0] sm:$0xff]
    %v442 = vld [vmem:[#allocation2 + $0xa8] sm:$0xff]
    %v443 = vld [vmem:[#allocation2 + $0xb0] sm:$0xff]
    %v444 = vld [vmem:[#allocation2 + $0xb8] sm:$0xff]
    %v445 = vld [vmem:[#allocation2 + $0xc0] sm:$0xff]
    %v446 = vld [vmem:[#allocation2 + $0xc8] sm:$0xff]
    %v447 = vld [vmem:[#allocation2 + $0xd0] sm:$0xff]
    %v448 = vld [vmem:[#allocation2 + $0xd8] sm:$0xff]
    %v449 = vld [vmem:[#allocation2 + $0xe0] sm:$0xff]
    %v450 = vld [vmem:[#allocation2 + $0xe8] sm:$0xff]
    %v451 = vld [vmem:[#allocation2 + $0xf0] sm:$0xff]
    %v452 = vld [vmem:[#allocation2 + $0xf8] sm:$0xff]
    %v453 = vld [vmem:[#allocation2 + $0x100] sm:$0xff]
    %v454 = vld [vmem:[#allocation2 + $0x108] sm:$0xff]
    %v455 = vld [vmem:[#allocation2 + $0x110] sm:$0xff]
    %v456 = vld [vmem:[#allocation2 + $0x118] sm:$0xff]
    %vm457 = vcmask 588800
    %v459 = vsel %vm457, %v420, 0
    %461 = vmatprep.subr.mxu0 %v422
    %462 = vmatpush1.msra.mxu0 %v421
    %463 = vmatprep.subr.mxu0 %v426
    %464 = vmatpush1.msra.mxu0 %v425
    %465 = vmatprep.subr.mxu0 %v430
    %466 = vmatpush1.msra.mxu0 %v429
    %467 = vmatprep.subr.mxu0 %v434
    %468 = vmatpush1.msra.mxu0 %v433
    %469 = vmatprep.subr.mxu0 %v438
    %470 = vmatpush1.msra.mxu0 %v437
    %471 = vmatprep.subr.mxu0 %v442
    %472 = vmatpush1.msra.mxu0 %v441
    %473 = vmatprep.subr.mxu0 %v446
    %474 = vmatpush1.msra.mxu0 %v445
    %475 = vmatprep.subr.mxu0 %v450
    %476 = vmatpush1.msra.mxu0 %v449
    %477 = vmatprep.subr.mxu0 %v454
    %478 = vmatpush1.msra.mxu0 %v453
    %479 = vmatprep.subr.mxu0 0.0
    %480 = vmatpush1.msra.mxu0 0.0
    %481 = vmatprep.subr.mxu0 0.0
    %482 = vmatpush1.msra.mxu0 0.0
    %483 = vmatprep.subr.mxu0 0.0
    %484 = vmatpush1.msra.mxu0 0.0
    %485 = vmatprep.subr.mxu0 0.0
    %486 = vmatpush1.msra.mxu0 0.0
    %487 = vmatprep.subr.mxu0 0.0
    %488 = vmatpush1.msra.mxu0 0.0
    %489 = vmatprep.subr.mxu0 0.0
    %490 = vmatpush1.msra.mxu0 0.0
    %491 = vmatprep.subr.mxu0 0.0
    %492 = vmatpush1.msra.mxu0 0.0
    %493 = vmatprep.subr.mxu0 0.0
    %494 = vmatpush1.msra.mxu0 0.0
    %495 = vmatprep.subr.mxu0 0.0
    %496 = vmatpush1.msra.mxu0 0.0
    %497 = vmatprep.subr.mxu0 0.0
    %498 = vmatpush1.msra.mxu0 0.0
    %499 = vmatprep.subr.mxu0 0.0
    %500 = vmatpush1.msra.mxu0 0.0
    %501 = vmatprep.subr.mxu0 0.0
    %502 = vmatpush1.msra.mxu0 0.0
    %503 = vmatprep.subr.mxu0 0.0
    %504 = vmatpush1.msra.mxu0 0.0
    %505 = vmatprep.subr.mxu0 0.0
    %506 = vmatpush1.msra.mxu0 0.0
    %507 = vmatprep.subr.mxu0 0.0
    %508 = vmatpush1.msra.mxu0 0.0
    %509 = vmatprep.subr.mxu0 0.0
    %510 = vmatpush1.msra.mxu0 0.0
    %511 = vmatprep.subr.mxu0 0.0
    %512 = vmatpush1.msra.mxu0 0.0
    %513 = vmatprep.subr.mxu0 0.0
    %514 = vmatpush1.msra.mxu0 0.0
    %515 = vmatprep.subr.mxu0 0.0
    %516 = vmatpush1.msra.mxu0 0.0
    %517 = vmatprep.subr.mxu0 0.0
    %518 = vmatpush1.msra.mxu0 0.0
    %519 = vmatprep.subr.mxu0 0.0
    %520 = vmatpush1.msra.mxu0 0.0
    %521 = vmatprep.subr.mxu0 0.0
    %522 = vmatpush1.msra.mxu0 0.0
    %523 = vmatprep.subr.mxu0 0.0
    %524 = vmatpush1.msra.mxu0 0.0
    %525 = vmatprep.mubr.f32.mxu0 0.0
    %526 = vmatmul.mubr.f32.gmra.mrb[0].mxu0 %v459
    %v527 = vpop.f32.mrb[0].mxu0
    %v528 = vadd.f32 0.0, %v527
    %v529 = vpop.f32.mrb[0].mxu0
    %v530 = vadd.f32 0.0, %v529
    %531 = vdwg.mxu0
    %532 = vmatprep.subr.mxu0 %v424
    %533 = vmatpush1.msra.mxu0 %v423
    %534 = vmatprep.subr.mxu0 %v428
    %535 = vmatpush1.msra.mxu0 %v427
    %536 = vmatprep.subr.mxu0 %v432
    %537 = vmatpush1.msra.mxu0 %v431
    %538 = vmatprep.subr.mxu0 %v436
    %539 = vmatpush1.msra.mxu0 %v435
    %540 = vmatprep.subr.mxu0 %v440
    %541 = vmatpush1.msra.mxu0 %v439
    %542 = vmatprep.subr.mxu0 %v444
    %543 = vmatpush1.msra.mxu0 %v443
    %544 = vmatprep.subr.mxu0 %v448
    %545 = vmatpush1.msra.mxu0 %v447
    %546 = vmatprep.subr.mxu0 %v452
    %547 = vmatpush1.msra.mxu0 %v451
    %548 = vmatprep.subr.mxu0 %v456
    %549 = vmatpush1.msra.mxu0 %v455
    %550 = vmatprep.subr.mxu0 0.0
    %551 = vmatpush1.msra.mxu0 0.0
    %552 = vmatprep.subr.mxu0 0.0
    %553 = vmatpush1.msra.mxu0 0.0
    %554 = vmatprep.subr.mxu0 0.0
    %555 = vmatpush1.msra.mxu0 0.0
    %556 = vmatprep.subr.mxu0 0.0
    %557 = vmatpush1.msra.mxu0 0.0
    %558 = vmatprep.subr.mxu0 0.0
    %559 = vmatpush1.msra.mxu0 0.0
    %560 = vmatprep.subr.mxu0 0.0
    %561 = vmatpush1.msra.mxu0 0.0
    %562 = vmatprep.subr.mxu0 0.0
    %563 = vmatpush1.msra.mxu0 0.0
    %564 = vmatprep.subr.mxu0 0.0
    %565 = vmatpush1.msra.mxu0 0.0
    %566 = vmatprep.subr.mxu0 0.0
    %567 = vmatpush1.msra.mxu0 0.0
    %568 = vmatprep.subr.mxu0 0.0
    %569 = vmatpush1.msra.mxu0 0.0
    %570 = vmatprep.subr.mxu0 0.0
    %571 = vmatpush1.msra.mxu0 0.0
    %572 = vmatprep.subr.mxu0 0.0
    %573 = vmatpush1.msra.mxu0 0.0
    %574 = vmatprep.subr.mxu0 0.0
    %575 = vmatpush1.msra.mxu0 0.0
    %576 = vmatprep.subr.mxu0 0.0
    %577 = vmatpush1.msra.mxu0 0.0
    %578 = vmatprep.subr.mxu0 0.0
    %579 = vmatpush1.msra.mxu0 0.0
    %580 = vmatprep.subr.mxu0 0.0
    %581 = vmatpush1.msra.mxu0 0.0
    %582 = vmatprep.subr.mxu0 0.0
    %583 = vmatpush1.msra.mxu0 0.0
    %584 = vmatprep.subr.mxu0 0.0
    %585 = vmatpush1.msra.mxu0 0.0
    %586 = vmatprep.subr.mxu0 0.0
    %587 = vmatpush1.msra.mxu0 0.0
    %588 = vmatprep.subr.mxu0 0.0
    %589 = vmatpush1.msra.mxu0 0.0
    %590 = vmatprep.subr.mxu0 0.0
    %591 = vmatpush1.msra.mxu0 0.0
    %592 = vmatprep.subr.mxu0 0.0
    %593 = vmatpush1.msra.mxu0 0.0
    %594 = vmatprep.subr.mxu0 0.0
    %595 = vmatpush1.msra.mxu0 0.0
    %596 = vmatprep.mubr.f32.mxu0 0.0
    %597 = vmatmul.mubr.f32.gmra.mrb[0].mxu0 %v459
    %v598 = vpop.f32.mrb[0].mxu0
    %v599 = vadd.f32 0.0, %v598
    %v600 = vpop.f32.mrb[0].mxu0
    %v601 = vadd.f32 0.0, %v600
    %602 = vdwg.mxu0
    %v603 = vmul.f32 %v528, 0.5
    %v604 = vmul.f32 %v530, 0.5
    %v605 = vmul.f32 %v599, 0.5
    %v606 = vmul.f32 %v601, 0.5
    %v607 = vmul.f32 %v528, 0.70710677
    %v608 = vmul.f32 %v530, 0.70710677
    %v609 = vmul.f32 %v599, 0.70710677
    %v610 = vmul.f32 %v601, 0.70710677
    %v611 = vand.u32 2147483647, %v607
    %v612 = vand.u32 2147483647, %v608
    %v613 = vand.u32 2147483647, %v609
    %v614 = vand.u32 2147483647, %v610
    %v615 = vmul.f32 %v611, 0.3275911
    %v616 = vmul.f32 %v612, 0.3275911
    %v617 = vmul.f32 %v613, 0.3275911
    %v618 = vmul.f32 %v614, 0.3275911
    %v619 = vadd.f32 %v615, 1.0
    %v620 = vadd.f32 %v616, 1.0
    %v621 = vadd.f32 %v617, 1.0
    %v622 = vadd.f32 %v618, 1.0
    %v623 = vrcp.pop %v619
    %v624 = vrcp.pop %v620
    %v625 = vrcp.pop %v621
    %v626 = vrcp.pop %v622
    %v627 = vmul.f32 %v619, %v623
    %v628 = vmul.f32 %v620, %v624
    %v629 = vmul.f32 %v621, %v625
    %v630 = vmul.f32 %v622, %v626
    %v631 = vsub.f32 2.0, %v627
    %v632 = vsub.f32 2.0, %v628
    %v633 = vsub.f32 2.0, %v629
    %v634 = vsub.f32 2.0, %v630
    %v635 = vmul.f32 %v623, %v631
    %v636 = vmul.f32 %v624, %v632
    %v637 = vmul.f32 %v625, %v633
    %v638 = vmul.f32 %v626, %v634
    %v639 = vmul.f32 %v635, 1.0614054
    %v640 = vmul.f32 %v636, 1.0614054
    %v641 = vmul.f32 %v637, 1.0614054
    %v642 = vmul.f32 %v638, 1.0614054
    %v643 = vadd.f32 %v639, -1.4531521
    %v644 = vadd.f32 %v640, -1.4531521
    %v645 = vadd.f32 %v641, -1.4531521
    %v646 = vadd.f32 %v642, -1.4531521
    %v647 = vmul.f32 %v635, %v643
    %v648 = vmul.f32 %v636, %v644
    %v649 = vmul.f32 %v637, %v645
    %v650 = vmul.f32 %v638, %v646
    %v651 = vadd.f32 %v647, 1.4214138
    %v652 = vadd.f32 %v648, 1.4214138
    %v653 = vadd.f32 %v649, 1.4214138
    %v654 = vadd.f32 %v650, 1.4214138
    %v655 = vmul.f32 %v635, %v651
    %v656 = vmul.f32 %v636, %v652
    %v657 = vmul.f32 %v637, %v653
    %v658 = vmul.f32 %v638, %v654
    %v659 = vadd.f32 %v655, -0.28449672
    %v660 = vadd.f32 %v656, -0.28449672
    %v661 = vadd.f32 %v657, -0.28449672
    %v662 = vadd.f32 %v658, -0.28449672
    %v663 = vmul.f32 %v635, %v659
    %v664 = vmul.f32 %v636, %v660
    %v665 = vmul.f32 %v637, %v661
    %v666 = vmul.f32 %v638, %v662
    %v667 = vadd.f32 %v663, 0.2548296
    %v668 = vadd.f32 %v664, 0.2548296
    %v669 = vadd.f32 %v665, 0.2548296
    %v670 = vadd.f32 %v666, 0.2548296
    %v671 = vmul.f32 %v635, %v667
    %v672 = vmul.f32 %v636, %v668
    %v673 = vmul.f32 %v637, %v669
    %v674 = vmul.f32 %v638, %v670
    %v675 = vsub.f32 0.0, %v611
    %v676 = vsub.f32 0.0, %v612
    %v677 = vsub.f32 0.0, %v613
    %v678 = vsub.f32 0.0, %v614
    %v679 = vmul.f32 %v675, %v611
    %v680 = vmul.f32 %v676, %v612
    %v681 = vmul.f32 %v677, %v613
    %v682 = vmul.f32 %v678, %v614
    %v683 = vmul.f32 %v679, 1.442695
    %v684 = vpow.pop %v683
    %v685 = vmul.f32 %v680, 1.442695
    %v686 = vpow.pop %v685
    %v687 = vmul.f32 %v681, 1.442695
    %v688 = vpow.pop %v687
    %v689 = vmul.f32 %v682, 1.442695
    %v690 = vpow.pop %v689
    %v691 = vmul.f32 %v671, %v684
    %v692 = vmul.f32 %v672, %v686
    %v693 = vmul.f32 %v673, %v688
    %v694 = vmul.f32 %v674, %v690
    %v695 = vsub.f32 1.0, %v691
    %v696 = vsub.f32 1.0, %v692
    %v697 = vsub.f32 1.0, %v693
    %v698 = vsub.f32 1.0, %v694
    %vm699 = vcmp.ge.f32.partialorder %v607, 0.0
    %vm700 = vcmp.ge.f32.partialorder %v608, 0.0
    %vm701 = vcmp.ge.f32.partialorder %v609, 0.0
    %vm702 = vcmp.ge.f32.partialorder %v610, 0.0
    %v703 = vsub.f32 0.0, %v695
    %v704 = vsub.f32 0.0, %v696
    %v705 = vsub.f32 0.0, %v697
    %v706 = vsub.f32 0.0, %v698
    %v707 = vsel %vm699, %v695, %v703
    %v708 = vsel %vm700, %v696, %v704
    %v709 = vsel %vm701, %v697, %v705
    %v710 = vsel %vm702, %v698, %v706
    %v711 = vadd.f32 %v707, 1.0
    %v712 = vadd.f32 %v708, 1.0
    %v713 = vadd.f32 %v709, 1.0
    %v714 = vadd.f32 %v710, 1.0
    %v715 = vmul.f32 %v603, %v711
    %v716 = vmul.f32 %v604, %v712
    %v717 = vmul.f32 %v605, %v713
    %v718 = vmul.f32 %v606, %v714
    %s719 = scalar_lea.vmem [#allocation8], 8
    %v720 = vld [vmem:[%s719] sm:$0xff]
    %v722 = vsel %vm457, %v720, 0
    %724 = vmatprep.subr.mxu0 %v422
    %725 = vmatpush1.msra.mxu0 %v421
    %726 = vmatprep.subr.mxu0 %v426
    %727 = vmatpush1.msra.mxu0 %v425
    %728 = vmatprep.subr.mxu0 %v430
    %729 = vmatpush1.msra.mxu0 %v429
    %730 = vmatprep.subr.mxu0 %v434
    %731 = vmatpush1.msra.mxu0 %v433
    %732 = vmatprep.subr.mxu0 %v438
    %733 = vmatpush1.msra.mxu0 %v437
    %734 = vmatprep.subr.mxu0 %v442
    %735 = vmatpush1.msra.mxu0 %v441
    %736 = vmatprep.subr.mxu0 %v446
    %737 = vmatpush1.msra.mxu0 %v445
    %738 = vmatprep.subr.mxu0 %v450
    %739 = vmatpush1.msra.mxu0 %v449
    %740 = vmatprep.subr.mxu0 %v454
    %741 = vmatpush1.msra.mxu0 %v453
    %742 = vmatprep.subr.mxu0 0.0
    %743 = vmatpush1.msra.mxu0 0.0
    %744 = vmatprep.subr.mxu0 0.0
    %745 = vmatpush1.msra.mxu0 0.0
    %746 = vmatprep.subr.mxu0 0.0
    %747 = vmatpush1.msra.mxu0 0.0
    %748 = vmatprep.subr.mxu0 0.0
    %749 = vmatpush1.msra.mxu0 0.0
    %750 = vmatprep.subr.mxu0 0.0
    %751 = vmatpush1.msra.mxu0 0.0
    %752 = vmatprep.subr.mxu0 0.0
    %753 = vmatpush1.msra.mxu0 0.0
    %754 = vmatprep.subr.mxu0 0.0
    %755 = vmatpush1.msra.mxu0 0.0
    %756 = vmatprep.subr.mxu0 0.0
    %757 = vmatpush1.msra.mxu0 0.0
    %758 = vmatprep.subr.mxu0 0.0
    %759 = vmatpush1.msra.mxu0 0.0
    %760 = vmatprep.subr.mxu0 0.0
    %761 = vmatpush1.msra.mxu0 0.0
    %762 = vmatprep.subr.mxu0 0.0
    %763 = vmatpush1.msra.mxu0 0.0
    %764 = vmatprep.subr.mxu0 0.0
    %765 = vmatpush1.msra.mxu0 0.0
    %766 = vmatprep.subr.mxu0 0.0
    %767 = vmatpush1.msra.mxu0 0.0
    %768 = vmatprep.subr.mxu0 0.0
    %769 = vmatpush1.msra.mxu0 0.0
    %770 = vmatprep.subr.mxu0 0.0
    %771 = vmatpush1.msra.mxu0 0.0
    %772 = vmatprep.subr.mxu0 0.0
    %773 = vmatpush1.msra.mxu0 0.0
    %774 = vmatprep.subr.mxu0 0.0
    %775 = vmatpush1.msra.mxu0 0.0
    %776 = vmatprep.subr.mxu0 0.0
    %777 = vmatpush1.msra.mxu0 0.0
    %778 = vmatprep.subr.mxu0 0.0
    %779 = vmatpush1.msra.mxu0 0.0
    %780 = vmatprep.subr.mxu0 0.0
    %781 = vmatpush1.msra.mxu0 0.0
    %782 = vmatprep.subr.mxu0 0.0
    %783 = vmatpush1.msra.mxu0 0.0
    %784 = vmatprep.subr.mxu0 0.0
    %785 = vmatpush1.msra.mxu0 0.0
    %786 = vmatprep.subr.mxu0 0.0
    %787 = vmatpush1.msra.mxu0 0.0
    %788 = vmatprep.mubr.f32.mxu0 0.0
    %789 = vmatmul.mubr.f32.gmra.mrb[0].mxu0 %v722
    %v790 = vpop.f32.mrb[0].mxu0
    %v791 = vadd.f32 0.0, %v790
    %v792 = vpop.f32.mrb[0].mxu0
    %v793 = vadd.f32 0.0, %v792
    %794 = vdwg.mxu0
    %795 = vmatprep.subr.mxu0 %v424
    %796 = vmatpush1.msra.mxu0 %v423
    %797 = vmatprep.subr.mxu0 %v428
    %798 = vmatpush1.msra.mxu0 %v427
    %799 = vmatprep.subr.mxu0 %v432
    %800 = vmatpush1.msra.mxu0 %v431
    %801 = vmatprep.subr.mxu0 %v436
    %802 = vmatpush1.msra.mxu0 %v435
    %803 = vmatprep.subr.mxu0 %v440
    %804 = vmatpush1.msra.mxu0 %v439
    %805 = vmatprep.subr.mxu0 %v444
    %806 = vmatpush1.msra.mxu0 %v443
    %807 = vmatprep.subr.mxu0 %v448
    %808 = vmatpush1.msra.mxu0 %v447
    %809 = vmatprep.subr.mxu0 %v452
    %810 = vmatpush1.msra.mxu0 %v451
    %811 = vmatprep.subr.mxu0 %v456
    %812 = vmatpush1.msra.mxu0 %v455
    %813 = vmatprep.subr.mxu0 0.0
    %814 = vmatpush1.msra.mxu0 0.0
    %815 = vmatprep.subr.mxu0 0.0
    %816 = vmatpush1.msra.mxu0 0.0
    %817 = vmatprep.subr.mxu0 0.0
    %818 = vmatpush1.msra.mxu0 0.0
    %819 = vmatprep.subr.mxu0 0.0
    %820 = vmatpush1.msra.mxu0 0.0
    %821 = vmatprep.subr.mxu0 0.0
    %822 = vmatpush1.msra.mxu0 0.0
    %823 = vmatprep.subr.mxu0 0.0
    %824 = vmatpush1.msra.mxu0 0.0
    %825 = vmatprep.subr.mxu0 0.0
    %826 = vmatpush1.msra.mxu0 0.0
    %827 = vmatprep.subr.mxu0 0.0
    %828 = vmatpush1.msra.mxu0 0.0
    %829 = vmatprep.subr.mxu0 0.0
    %830 = vmatpush1.msra.mxu0 0.0
    %831 = vmatprep.subr.mxu0 0.0
    %832 = vmatpush1.msra.mxu0 0.0
    %833 = vmatprep.subr.mxu0 0.0
    %834 = vmatpush1.msra.mxu0 0.0
    %835 = vmatprep.subr.mxu0 0.0
    %836 = vmatpush1.msra.mxu0 0.0
    %837 = vmatprep.subr.mxu0 0.0
    %838 = vmatpush1.msra.mxu0 0.0
    %839 = vmatprep.subr.mxu0 0.0
    %840 = vmatpush1.msra.mxu0 0.0
    %841 = vmatprep.subr.mxu0 0.0
    %842 = vmatpush1.msra.mxu0 0.0
    %843 = vmatprep.subr.mxu0 0.0
    %844 = vmatpush1.msra.mxu0 0.0
    %845 = vmatprep.subr.mxu0 0.0
    %846 = vmatpush1.msra.mxu0 0.0
    %847 = vmatprep.subr.mxu0 0.0
    %848 = vmatpush1.msra.mxu0 0.0
    %849 = vmatprep.subr.mxu0 0.0
    %850 = vmatpush1.msra.mxu0 0.0
    %851 = vmatprep.subr.mxu0 0.0
    %852 = vmatpush1.msra.mxu0 0.0
    %853 = vmatprep.subr.mxu0 0.0
    %854 = vmatpush1.msra.mxu0 0.0
    %855 = vmatprep.subr.mxu0 0.0
    %856 = vmatpush1.msra.mxu0 0.0
    %857 = vmatprep.subr.mxu0 0.0
    %858 = vmatpush1.msra.mxu0 0.0
    %859 = vmatprep.mubr.f32.mxu0 0.0
    %860 = vmatmul.mubr.f32.gmra.mrb[0].mxu0 %v722
    %v861 = vpop.f32.mrb[0].mxu0
    %v862 = vadd.f32 0.0, %v861
    %v863 = vpop.f32.mrb[0].mxu0
    %v864 = vadd.f32 0.0, %v863
    %865 = vdwg.mxu0
    %v866 = vmul.f32 %v791, 0.5
    %v867 = vmul.f32 %v793, 0.5
    %v868 = vmul.f32 %v862, 0.5
    %v869 = vmul.f32 %v864, 0.5
    %v870 = vmul.f32 %v791, 0.70710677
    %v871 = vmul.f32 %v793, 0.70710677
    %v872 = vmul.f32 %v862, 0.70710677
    %v873 = vmul.f32 %v864, 0.70710677
    %v874 = vand.u32 2147483647, %v870
    %v875 = vand.u32 2147483647, %v871
    %v876 = vand.u32 2147483647, %v872
    %v877 = vand.u32 2147483647, %v873
    %v878 = vmul.f32 %v874, 0.3275911
    %v879 = vmul.f32 %v875, 0.3275911
    %v880 = vmul.f32 %v876, 0.3275911
    %v881 = vmul.f32 %v877, 0.3275911
    %v882 = vadd.f32 %v878, 1.0
    %v883 = vadd.f32 %v879, 1.0
    %v884 = vadd.f32 %v880, 1.0
    %v885 = vadd.f32 %v881, 1.0
    %v886 = vrcp.pop %v882
    %v887 = vrcp.pop %v883
    %v888 = vrcp.pop %v884
    %v889 = vrcp.pop %v885
    %v890 = vmul.f32 %v882, %v886
    %v891 = vmul.f32 %v883, %v887
    %v892 = vmul.f32 %v884, %v888
    %v893 = vmul.f32 %v885, %v889
    %v894 = vsub.f32 2.0, %v890
    %v895 = vsub.f32 2.0, %v891
    %v896 = vsub.f32 2.0, %v892
    %v897 = vsub.f32 2.0, %v893
    %v898 = vmul.f32 %v886, %v894
    %v899 = vmul.f32 %v887, %v895
    %v900 = vmul.f32 %v888, %v896
    %v901 = vmul.f32 %v889, %v897
    %v902 = vmul.f32 %v898, 1.0614054
    %v903 = vmul.f32 %v899, 1.0614054
    %v904 = vmul.f32 %v900, 1.0614054
    %v905 = vmul.f32 %v901, 1.0614054
    %v906 = vadd.f32 %v902, -1.4531521
    %v907 = vadd.f32 %v903, -1.4531521
    %v908 = vadd.f32 %v904, -1.4531521
    %v909 = vadd.f32 %v905, -1.4531521
    %v910 = vmul.f32 %v898, %v906
    %v911 = vmul.f32 %v899, %v907
    %v912 = vmul.f32 %v900, %v908
    %v913 = vmul.f32 %v901, %v909
    %v914 = vadd.f32 %v910, 1.4214138
    %v915 = vadd.f32 %v911, 1.4214138
    %v916 = vadd.f32 %v912, 1.4214138
    %v917 = vadd.f32 %v913, 1.4214138
    %v918 = vmul.f32 %v898, %v914
    %v919 = vmul.f32 %v899, %v915
    %v920 = vmul.f32 %v900, %v916
    %v921 = vmul.f32 %v901, %v917
    %v922 = vadd.f32 %v918, -0.28449672
    %v923 = vadd.f32 %v919, -0.28449672
    %v924 = vadd.f32 %v920, -0.28449672
    %v925 = vadd.f32 %v921, -0.28449672
    %v926 = vmul.f32 %v898, %v922
    %v927 = vmul.f32 %v899, %v923
    %v928 = vmul.f32 %v900, %v924
    %v929 = vmul.f32 %v901, %v925
    %v930 = vadd.f32 %v926, 0.2548296
    %v931 = vadd.f32 %v927, 0.2548296
    %v932 = vadd.f32 %v928, 0.2548296
    %v933 = vadd.f32 %v929, 0.2548296
    %v934 = vmul.f32 %v898, %v930
    %v935 = vmul.f32 %v899, %v931
    %v936 = vmul.f32 %v900, %v932
    %v937 = vmul.f32 %v901, %v933
    %v938 = vsub.f32 0.0, %v874
    %v939 = vsub.f32 0.0, %v875
    %v940 = vsub.f32 0.0, %v876
    %v941 = vsub.f32 0.0, %v877
    %v942 = vmul.f32 %v938, %v874
    %v943 = vmul.f32 %v939, %v875
    %v944 = vmul.f32 %v940, %v876
    %v945 = vmul.f32 %v941, %v877
    %v946 = vmul.f32 %v942, 1.442695
    %v947 = vpow.pop %v946
    %v948 = vmul.f32 %v943, 1.442695
    %v949 = vpow.pop %v948
    %v950 = vmul.f32 %v944, 1.442695
    %v951 = vpow.pop %v950
    %v952 = vmul.f32 %v945, 1.442695
    %v953 = vpow.pop %v952
    %v954 = vmul.f32 %v934, %v947
    %v955 = vmul.f32 %v935, %v949
    %v956 = vmul.f32 %v936, %v951
    %v957 = vmul.f32 %v937, %v953
    %v958 = vsub.f32 1.0, %v954
    %v959 = vsub.f32 1.0, %v955
    %v960 = vsub.f32 1.0, %v956
    %v961 = vsub.f32 1.0, %v957
    %vm962 = vcmp.ge.f32.partialorder %v870, 0.0
    %vm963 = vcmp.ge.f32.partialorder %v871, 0.0
    %vm964 = vcmp.ge.f32.partialorder %v872, 0.0
    %vm965 = vcmp.ge.f32.partialorder %v873, 0.0
    %v966 = vsub.f32 0.0, %v958
    %v967 = vsub.f32 0.0, %v959
    %v968 = vsub.f32 0.0, %v960
    %v969 = vsub.f32 0.0, %v961
    %v970 = vsel %vm962, %v958, %v966
    %v971 = vsel %vm963, %v959, %v967
    %v972 = vsel %vm964, %v960, %v968
    %v973 = vsel %vm965, %v961, %v969
    %v974 = vadd.f32 %v970, 1.0
    %v975 = vadd.f32 %v971, 1.0
    %v976 = vadd.f32 %v972, 1.0
    %v977 = vadd.f32 %v973, 1.0
    %v978 = vmul.f32 %v866, %v974
    %v979 = vmul.f32 %v867, %v975
    %v980 = vmul.f32 %v868, %v976
    %v981 = vmul.f32 %v869, %v977
    %982 = vrot.lane.b32.xlu0 %v978, 17
    %v983 = vpop.permute.xlu0 %982
    %984 = vrot.lane.b32.xlu0 %v979, 17
    %v985 = vpop.permute.xlu0 %984
    %986 = vrot.lane.b32.xlu0 %v980, 17
    %v987 = vpop.permute.xlu0 %986
    %988 = vrot.lane.b32.xlu0 %v981, 17
    %v989 = vpop.permute.xlu0 %988
    %v990 = vsel %vm73, %v987, %v989
    %v991 = vsel %vm73, %v985, %v987
    %v992 = vsel %vm73, %v983, %v985
    %v993 = vsel %vm73, %v989, %v983
    %v994 = vld [vmem:[#allocation10] sm:$0xf]
    %v996 = vlaneseq
    %v997 = vshrl.u32 %v996, 7
    %v998 = vsub.s32 0, %v997
    %v999 = vrot.slane %v994, %v998
    %v1000 = vlaneseq
    %v1001 = vshrl.u32 %v1000, 7
    %v1002 = vsub.s32 1, %v1001
    %v1003 = vrot.slane %v994, %v1002
    %v1004 = vlaneseq
    %v1005 = vshrl.u32 %v1004, 7
    %v1006 = vsub.s32 2, %v1005
    %v1007 = vrot.slane %v994, %v1006
    %v1008 = vlaneseq
    %v1009 = vshrl.u32 %v1008, 7
    %v1010 = vsub.s32 3, %v1009
    %v1011 = vrot.slane %v994, %v1010
    %v1016 = vmul.f32 %v993, %v999
    %v1017 = vmul.f32 %v992, %v1003
    %v1018 = vmul.f32 %v991, %v1007
    %v1019 = vmul.f32 %v990, %v1011
    %1020 = vst [vmem:[#allocation2] sm:$0xff] %v1016
    %1021 = vst [vmem:[#allocation2 + $0x8] sm:$0xff] %v1017
    %1022 = vst [vmem:[#allocation2 + $0x10] sm:$0xff] %v1018
    %1023 = vst [vmem:[#allocation2 + $0x18] sm:$0xff] %v1019
    %1024 = vrot.lane.b32.xlu0 %v978, 16
    %v1025 = vpop.permute.xlu0 %1024
    %1026 = vrot.lane.b32.xlu0 %v979, 16
    %v1027 = vpop.permute.xlu0 %1026
    %1028 = vrot.lane.b32.xlu0 %v980, 16
    %v1029 = vpop.permute.xlu0 %1028
    %1030 = vrot.lane.b32.xlu0 %v981, 16
    %v1031 = vpop.permute.xlu0 %1030
    %v1032 = vsel %vm116, %v1029, %v1031
    %v1033 = vsel %vm116, %v1027, %v1029
    %v1034 = vsel %vm116, %v1025, %v1027
    %v1035 = vsel %vm116, %v1031, %v1025
    %v1036 = vld [vmem:[%s121] sm:$0xf]
    %v1038 = vlaneseq
    %v1039 = vshrl.u32 %v1038, 7
    %v1040 = vsub.s32 0, %v1039
    %v1041 = vrot.slane %v1036, %v1040
    %v1042 = vlaneseq
    %v1043 = vshrl.u32 %v1042, 7
    %v1044 = vsub.s32 1, %v1043
    %v1045 = vrot.slane %v1036, %v1044
    %v1046 = vlaneseq
    %v1047 = vshrl.u32 %v1046, 7
    %v1048 = vsub.s32 2, %v1047
    %v1049 = vrot.slane %v1036, %v1048
    %v1050 = vlaneseq
    %v1051 = vshrl.u32 %v1050, 7
    %v1052 = vsub.s32 3, %v1051
    %v1053 = vrot.slane %v1036, %v1052
    %v1058 = vmul.f32 %v1035, %v1041
    %v1059 = vmul.f32 %v1034, %v1045
    %v1060 = vmul.f32 %v1033, %v1049
    %v1061 = vmul.f32 %v1032, %v1053
    %1062 = vst [vmem:[#allocation2 + $0x20] sm:$0xff] %v1058
    %1063 = vst [vmem:[#allocation2 + $0x28] sm:$0xff] %v1059
    %1064 = vst [vmem:[#allocation2 + $0x30] sm:$0xff] %v1060
    %1065 = vst [vmem:[#allocation2 + $0x38] sm:$0xff] %v1061
    %1066 = vrot.lane.b32.xlu0 %v978, 15
    %v1067 = vpop.permute.xlu0 %1066
    %1068 = vrot.lane.b32.xlu0 %v979, 15
    %v1069 = vpop.permute.xlu0 %1068
    %1070 = vrot.lane.b32.xlu0 %v980, 15
    %v1071 = vpop.permute.xlu0 %1070
    %1072 = vrot.lane.b32.xlu0 %v981, 15
    %v1073 = vpop.permute.xlu0 %1072
    %v1074 = vsel %vm160, %v1071, %v1073
    %v1075 = vsel %vm160, %v1069, %v1071
    %v1076 = vsel %vm160, %v1067, %v1069
    %v1077 = vsel %vm160, %v1073, %v1067
    %v1078 = vld [vmem:[%s165] sm:$0xf]
    %v1080 = vlaneseq
    %v1081 = vshrl.u32 %v1080, 7
    %v1082 = vsub.s32 0, %v1081
    %v1083 = vrot.slane %v1078, %v1082
    %v1084 = vlaneseq
    %v1085 = vshrl.u32 %v1084, 7
    %v1086 = vsub.s32 1, %v1085
    %v1087 = vrot.slane %v1078, %v1086
    %v1088 = vlaneseq
    %v1089 = vshrl.u32 %v1088, 7
    %v1090 = vsub.s32 2, %v1089
    %v1091 = vrot.slane %v1078, %v1090
    %v1092 = vlaneseq
    %v1093 = vshrl.u32 %v1092, 7
    %v1094 = vsub.s32 3, %v1093
    %v1095 = vrot.slane %v1078, %v1094
    %v1100 = vmul.f32 %v1077, %v1083
    %v1101 = vmul.f32 %v1076, %v1087
    %v1102 = vmul.f32 %v1075, %v1091
    %v1103 = vmul.f32 %v1074, %v1095
    %1104 = vst [vmem:[#allocation2 + $0x40] sm:$0xff] %v1100
    %1105 = vst [vmem:[#allocation2 + $0x48] sm:$0xff] %v1101
    %1106 = vst [vmem:[#allocation2 + $0x50] sm:$0xff] %v1102
    %1107 = vst [vmem:[#allocation2 + $0x58] sm:$0xff] %v1103
    %1108 = vrot.lane.b32.xlu0 %v978, 1
    %v1109 = vpop.permute.xlu0 %1108
    %1110 = vrot.lane.b32.xlu0 %v979, 1
    %v1111 = vpop.permute.xlu0 %1110
    %1112 = vrot.lane.b32.xlu0 %v980, 1
    %v1113 = vpop.permute.xlu0 %1112
    %1114 = vrot.lane.b32.xlu0 %v981, 1
    %v1115 = vpop.permute.xlu0 %1114
    %v1116 = vsel %vm204, %v1113, %v1115
    %v1117 = vsel %vm204, %v1111, %v1113
    %v1118 = vsel %vm204, %v1109, %v1111
    %v1119 = vsel %vm204, %v1115, %v1109
    %v1120 = vld [vmem:[%s209] sm:$0xf]
    %v1122 = vlaneseq
    %v1123 = vshrl.u32 %v1122, 7
    %v1124 = vsub.s32 0, %v1123
    %v1125 = vrot.slane %v1120, %v1124
    %v1126 = vlaneseq
    %v1127 = vshrl.u32 %v1126, 7
    %v1128 = vsub.s32 1, %v1127
    %v1129 = vrot.slane %v1120, %v1128
    %v1130 = vlaneseq
    %v1131 = vshrl.u32 %v1130, 7
    %v1132 = vsub.s32 2, %v1131
    %v1133 = vrot.slane %v1120, %v1132
    %v1134 = vlaneseq
    %v1135 = vshrl.u32 %v1134, 7
    %v1136 = vsub.s32 3, %v1135
    %v1137 = vrot.slane %v1120, %v1136
    %v1142 = vmul.f32 %v1119, %v1125
    %v1143 = vmul.f32 %v1118, %v1129
    %v1144 = vmul.f32 %v1117, %v1133
    %v1145 = vmul.f32 %v1116, %v1137
    %1146 = vst [vmem:[#allocation2 + $0x60] sm:$0xff] %v1142
    %1147 = vst [vmem:[#allocation2 + $0x68] sm:$0xff] %v1143
    %1148 = vst [vmem:[#allocation2 + $0x70] sm:$0xff] %v1144
    %1149 = vst [vmem:[#allocation2 + $0x78] sm:$0xff] %v1145
    %1150 = vst [vmem:[#allocation2 + $0x80] sm:$0xff] %v978
    %1151 = vst [vmem:[#allocation2 + $0x88] sm:$0xff] %v979
    %1152 = vst [vmem:[#allocation2 + $0x90] sm:$0xff] %v980
    %1153 = vst [vmem:[#allocation2 + $0x98] sm:$0xff] %v981
    %1154 = vrot.lane.b32.xlu0 %v978, 127
    %v1155 = vpop.permute.xlu0 %1154
    %1156 = vrot.lane.b32.xlu0 %v979, 127
    %v1157 = vpop.permute.xlu0 %1156
    %1158 = vrot.lane.b32.xlu0 %v980, 127
    %v1159 = vpop.permute.xlu0 %1158
    %1160 = vrot.lane.b32.xlu0 %v981, 127
    %v1161 = vpop.permute.xlu0 %1160
    %v1162 = vsel %vm252, %v1159, %v1161
    %v1163 = vsel %vm252, %v1157, %v1159
    %v1164 = vsel %vm252, %v1155, %v1157
    %v1165 = vsel %vm252, %v1161, %v1155
    %v1166 = vld [vmem:[%s257] sm:$0xf]
    %v1168 = vlaneseq
    %v1169 = vshrl.u32 %v1168, 7
    %v1170 = vsub.s32 0, %v1169
    %v1171 = vrot.slane %v1166, %v1170
    %v1172 = vlaneseq
    %v1173 = vshrl.u32 %v1172, 7
    %v1174 = vsub.s32 1, %v1173
    %v1175 = vrot.slane %v1166, %v1174
    %v1176 = vlaneseq
    %v1177 = vshrl.u32 %v1176, 7
    %v1178 = vsub.s32 2, %v1177
    %v1179 = vrot.slane %v1166, %v1178
    %v1180 = vlaneseq
    %v1181 = vshrl.u32 %v1180, 7
    %v1182 = vsub.s32 3, %v1181
    %v1183 = vrot.slane %v1166, %v1182
    %v1188 = vmul.f32 %v1164, %v1171
    %v1189 = vmul.f32 %v1163, %v1175
    %v1190 = vmul.f32 %v1162, %v1179
    %v1191 = vmul.f32 %v1165, %v1183
    %1192 = vst [vmem:[#allocation2 + $0xa0] sm:$0xff] %v1188
    %1193 = vst [vmem:[#allocation2 + $0xa8] sm:$0xff] %v1189
    %1194 = vst [vmem:[#allocation2 + $0xb0] sm:$0xff] %v1190
    %1195 = vst [vmem:[#allocation2 + $0xb8] sm:$0xff] %v1191
    %1196 = vrot.lane.b32.xlu0 %v978, 113
    %v1197 = vpop.permute.xlu0 %1196
    %1198 = vrot.lane.b32.xlu0 %v979, 113
    %v1199 = vpop.permute.xlu0 %1198
    %1200 = vrot.lane.b32.xlu0 %v980, 113
    %v1201 = vpop.permute.xlu0 %1200
    %1202 = vrot.lane.b32.xlu0 %v981, 113
    %v1203 = vpop.permute.xlu0 %1202
    %v1204 = vsel %vm296, %v1201, %v1203
    %v1205 = vsel %vm296, %v1199, %v1201
    %v1206 = vsel %vm296, %v1197, %v1199
    %v1207 = vsel %vm296, %v1203, %v1197
    %v1208 = vld [vmem:[%s301] sm:$0xf]
    %v1210 = vlaneseq
    %v1211 = vshrl.u32 %v1210, 7
    %v1212 = vsub.s32 0, %v1211
    %v1213 = vrot.slane %v1208, %v1212
    %v1214 = vlaneseq
    %v1215 = vshrl.u32 %v1214, 7
    %v1216 = vsub.s32 1, %v1215
    %v1217 = vrot.slane %v1208, %v1216
    %v1218 = vlaneseq
    %v1219 = vshrl.u32 %v1218, 7
    %v1220 = vsub.s32 2, %v1219
    %v1221 = vrot.slane %v1208, %v1220
    %v1222 = vlaneseq
    %v1223 = vshrl.u32 %v1222, 7
    %v1224 = vsub.s32 3, %v1223
    %v1225 = vrot.slane %v1208, %v1224
    %v1230 = vmul.f32 %v1206, %v1213
    %v1231 = vmul.f32 %v1205, %v1217
    %v1232 = vmul.f32 %v1204, %v1221
    %v1233 = vmul.f32 %v1207, %v1225
    %1234 = vst [vmem:[#allocation2 + $0xc0] sm:$0xff] %v1230
    %1235 = vst [vmem:[#allocation2 + $0xc8] sm:$0xff] %v1231
    %1236 = vst [vmem:[#allocation2 + $0xd0] sm:$0xff] %v1232
    %1237 = vst [vmem:[#allocation2 + $0xd8] sm:$0xff] %v1233
    %1238 = vrot.lane.b32.xlu0 %v978, 112
    %v1239 = vpop.permute.xlu0 %1238
    %1240 = vrot.lane.b32.xlu0 %v979, 112
    %v1241 = vpop.permute.xlu0 %1240
    %1242 = vrot.lane.b32.xlu0 %v980, 112
    %v1243 = vpop.permute.xlu0 %1242
    %1244 = vrot.lane.b32.xlu0 %v981, 112
    %v1245 = vpop.permute.xlu0 %1244
    %v1246 = vsel %vm340, %v1243, %v1245
    %v1247 = vsel %vm340, %v1241, %v1243
    %v1248 = vsel %vm340, %v1239, %v1241
    %v1249 = vsel %vm340, %v1245, %v1239
    %v1250 = vld [vmem:[%s345] sm:$0xf]
    %v1252 = vlaneseq
    %v1253 = vshrl.u32 %v1252, 7
    %v1254 = vsub.s32 0, %v1253
    %v1255 = vrot.slane %v1250, %v1254
    %v1256 = vlaneseq
    %v1257 = vshrl.u32 %v1256, 7
    %v1258 = vsub.s32 1, %v1257
    %v1259 = vrot.slane %v1250, %v1258
    %v1260 = vlaneseq
    %v1261 = vshrl.u32 %v1260, 7
    %v1262 = vsub.s32 2, %v1261
    %v1263 = vrot.slane %v1250, %v1262
    %v1264 = vlaneseq
    %v1265 = vshrl.u32 %v1264, 7
    %v1266 = vsub.s32 3, %v1265
    %v1267 = vrot.slane %v1250, %v1266
    %v1272 = vmul.f32 %v1248, %v1255
    %v1273 = vmul.f32 %v1247, %v1259
    %v1274 = vmul.f32 %v1246, %v1263
    %v1275 = vmul.f32 %v1249, %v1267
    %1276 = vst [vmem:[#allocation2 + $0xe0] sm:$0xff] %v1272
    %1277 = vst [vmem:[#allocation2 + $0xe8] sm:$0xff] %v1273
    %1278 = vst [vmem:[#allocation2 + $0xf0] sm:$0xff] %v1274
    %1279 = vst [vmem:[#allocation2 + $0xf8] sm:$0xff] %v1275
    %1280 = vrot.lane.b32.xlu0 %v978, 111
    %v1281 = vpop.permute.xlu0 %1280
    %1282 = vrot.lane.b32.xlu0 %v979, 111
    %v1283 = vpop.permute.xlu0 %1282
    %1284 = vrot.lane.b32.xlu0 %v980, 111
    %v1285 = vpop.permute.xlu0 %1284
    %1286 = vrot.lane.b32.xlu0 %v981, 111
    %v1287 = vpop.permute.xlu0 %1286
    %v1288 = vsel %vm384, %v1285, %v1287
    %v1289 = vsel %vm384, %v1283, %v1285
    %v1290 = vsel %vm384, %v1281, %v1283
    %v1291 = vsel %vm384, %v1287, %v1281
    %v1292 = vld [vmem:[%s389] sm:$0xf]
    %v1294 = vlaneseq
    %v1295 = vshrl.u32 %v1294, 7
    %v1296 = vsub.s32 0, %v1295
    %v1297 = vrot.slane %v1292, %v1296
    %v1298 = vlaneseq
    %v1299 = vshrl.u32 %v1298, 7
    %v1300 = vsub.s32 1, %v1299
    %v1301 = vrot.slane %v1292, %v1300
    %v1302 = vlaneseq
    %v1303 = vshrl.u32 %v1302, 7
    %v1304 = vsub.s32 2, %v1303
    %v1305 = vrot.slane %v1292, %v1304
    %v1306 = vlaneseq
    %v1307 = vshrl.u32 %v1306, 7
    %v1308 = vsub.s32 3, %v1307
    %v1309 = vrot.slane %v1292, %v1308
    %v1314 = vmul.f32 %v1290, %v1297
    %v1315 = vmul.f32 %v1289, %v1301
    %v1316 = vmul.f32 %v1288, %v1305
    %v1317 = vmul.f32 %v1291, %v1309
    %1318 = vst [vmem:[#allocation2 + $0x100] sm:$0xff] %v1314
    %1319 = vst [vmem:[#allocation2 + $0x108] sm:$0xff] %v1315
    %1320 = vst [vmem:[#allocation2 + $0x110] sm:$0xff] %v1316
    %1321 = vst [vmem:[#allocation2 + $0x118] sm:$0xff] %v1317
    %s1322 = scalar_lea.vmem [#allocation8], 16
    %v1323 = vld [vmem:[%s1322] sm:$0xff]
    %v1324 = vld [vmem:[#allocation2] sm:$0xff]
    %v1325 = vld [vmem:[#allocation2 + $0x8] sm:$0xff]
    %v1326 = vld [vmem:[#allocation2 + $0x10] sm:$0xff]
    %v1327 = vld [vmem:[#allocation2 + $0x18] sm:$0xff]
    %v1328 = vld [vmem:[#allocation2 + $0x20] sm:$0xff]
    %v1329 = vld [vmem:[#allocation2 + $0x28] sm:$0xff]
    %v1330 = vld [vmem:[#allocation2 + $0x30] sm:$0xff]
    %v1331 = vld [vmem:[#allocation2 + $0x38] sm:$0xff]
    %v1332 = vld [vmem:[#allocation2 + $0x40] sm:$0xff]
    %v1333 = vld [vmem:[#allocation2 + $0x48] sm:$0xff]
    %v1334 = vld [vmem:[#allocation2 + $0x50] sm:$0xff]
    %v1335 = vld [vmem:[#allocation2 + $0x58] sm:$0xff]
    %v1336 = vld [vmem:[#allocation2 + $0x60] sm:$0xff]
    %v1337 = vld [vmem:[#allocation2 + $0x68] sm:$0xff]
    %v1338 = vld [vmem:[#allocation2 + $0x70] sm:$0xff]
    %v1339 = vld [vmem:[#allocation2 + $0x78] sm:$0xff]
    %v1340 = vld [vmem:[#allocation2 + $0x80] sm:$0xff]
    %v1341 = vld [vmem:[#allocation2 + $0x88] sm:$0xff]
    %v1342 = vld [vmem:[#allocation2 + $0x90] sm:$0xff]
    %v1343 = vld [vmem:[#allocation2 + $0x98] sm:$0xff]
    %v1344 = vld [vmem:[#allocation2 + $0xa0] sm:$0xff]
    %v1345 = vld [vmem:[#allocation2 + $0xa8] sm:$0xff]
    %v1346 = vld [vmem:[#allocation2 + $0xb0] sm:$0xff]
    %v1347 = vld [vmem:[#allocation2 + $0xb8] sm:$0xff]
    %v1348 = vld [vmem:[#allocation2 + $0xc0] sm:$0xff]
    %v1349 = vld [vmem:[#allocation2 + $0xc8] sm:$0xff]
    %v1350 = vld [vmem:[#allocation2 + $0xd0] sm:$0xff]
    %v1351 = vld [vmem:[#allocation2 + $0xd8] sm:$0xff]
    %v1352 = vld [vmem:[#allocation2 + $0xe0] sm:$0xff]
    %v1353 = vld [vmem:[#allocation2 + $0xe8] sm:$0xff]
    %v1354 = vld [vmem:[#allocation2 + $0xf0] sm:$0xff]
    %v1355 = vld [vmem:[#allocation2 + $0xf8] sm:$0xff]
    %v1356 = vld [vmem:[#allocation2 + $0x100] sm:$0xff]
    %v1357 = vld [vmem:[#allocation2 + $0x108] sm:$0xff]
    %v1358 = vld [vmem:[#allocation2 + $0x110] sm:$0xff]
    %v1359 = vld [vmem:[#allocation2 + $0x118] sm:$0xff]
    %v1361 = vsel %vm457, %v1323, 0
    %1363 = vmatprep.subr.mxu0 %v1325
    %1364 = vmatpush1.msra.mxu0 %v1324
    %1365 = vmatprep.subr.mxu0 %v1329
    %1366 = vmatpush1.msra.mxu0 %v1328
    %1367 = vmatprep.subr.mxu0 %v1333
    %1368 = vmatpush1.msra.mxu0 %v1332
    %1369 = vmatprep.subr.mxu0 %v1337
    %1370 = vmatpush1.msra.mxu0 %v1336
    %1371 = vmatprep.subr.mxu0 %v1341
    %1372 = vmatpush1.msra.mxu0 %v1340
    %1373 = vmatprep.subr.mxu0 %v1345
    %1374 = vmatpush1.msra.mxu0 %v1344
    %1375 = vmatprep.subr.mxu0 %v1349
    %1376 = vmatpush1.msra.mxu0 %v1348
    %1377 = vmatprep.subr.mxu0 %v1353
    %1378 = vmatpush1.msra.mxu0 %v1352
    %1379 = vmatprep.subr.mxu0 %v1357
    %1380 = vmatpush1.msra.mxu0 %v1356
    %1381 = vmatprep.subr.mxu0 0.0
    %1382 = vmatpush1.msra.mxu0 0.0
    %1383 = vmatprep.subr.mxu0 0.0
    %1384 = vmatpush1.msra.mxu0 0.0
    %1385 = vmatprep.subr.mxu0 0.0
    %1386 = vmatpush1.msra.mxu0 0.0
    %1387 = vmatprep.subr.mxu0 0.0
    %1388 = vmatpush1.msra.mxu0 0.0
    %1389 = vmatprep.subr.mxu0 0.0
    %1390 = vmatpush1.msra.mxu0 0.0
    %1391 = vmatprep.subr.mxu0 0.0
    %1392 = vmatpush1.msra.mxu0 0.0
    %1393 = vmatprep.subr.mxu0 0.0
    %1394 = vmatpush1.msra.mxu0 0.0
    %1395 = vmatprep.subr.mxu0 0.0
    %1396 = vmatpush1.msra.mxu0 0.0
    %1397 = vmatprep.subr.mxu0 0.0
    %1398 = vmatpush1.msra.mxu0 0.0
    %1399 = vmatprep.subr.mxu0 0.0
    %1400 = vmatpush1.msra.mxu0 0.0
    %1401 = vmatprep.subr.mxu0 0.0
    %1402 = vmatpush1.msra.mxu0 0.0
    %1403 = vmatprep.subr.mxu0 0.0
    %1404 = vmatpush1.msra.mxu0 0.0
    %1405 = vmatprep.subr.mxu0 0.0
    %1406 = vmatpush1.msra.mxu0 0.0
    %1407 = vmatprep.subr.mxu0 0.0
    %1408 = vmatpush1.msra.mxu0 0.0
    %1409 = vmatprep.subr.mxu0 0.0
    %1410 = vmatpush1.msra.mxu0 0.0
    %1411 = vmatprep.subr.mxu0 0.0
    %1412 = vmatpush1.msra.mxu0 0.0
    %1413 = vmatprep.subr.mxu0 0.0
    %1414 = vmatpush1.msra.mxu0 0.0
    %1415 = vmatprep.subr.mxu0 0.0
    %1416 = vmatpush1.msra.mxu0 0.0
    %1417 = vmatprep.subr.mxu0 0.0
    %1418 = vmatpush1.msra.mxu0 0.0
    %1419 = vmatprep.subr.mxu0 0.0
    %1420 = vmatpush1.msra.mxu0 0.0
    %1421 = vmatprep.subr.mxu0 0.0
    %1422 = vmatpush1.msra.mxu0 0.0
    %1423 = vmatprep.subr.mxu0 0.0
    %1424 = vmatpush1.msra.mxu0 0.0
    %1425 = vmatprep.subr.mxu0 0.0
    %1426 = vmatpush1.msra.mxu0 0.0
    %1427 = vmatprep.mubr.f32.mxu0 0.0
    %1428 = vmatmul.mubr.f32.gmra.mrb[0].mxu0 %v1361
    %v1429 = vpop.f32.mrb[0].mxu0
    %v1430 = vadd.f32 0.0, %v1429
    %v1431 = vpop.f32.mrb[0].mxu0
    %v1432 = vadd.f32 0.0, %v1431
    %1433 = vdwg.mxu0
    %1434 = vmatprep.subr.mxu0 %v1327
    %1435 = vmatpush1.msra.mxu0 %v1326
    %1436 = vmatprep.subr.mxu0 %v1331
    %1437 = vmatpush1.msra.mxu0 %v1330
    %1438 = vmatprep.subr.mxu0 %v1335
    %1439 = vmatpush1.msra.mxu0 %v1334
    %1440 = vmatprep.subr.mxu0 %v1339
    %1441 = vmatpush1.msra.mxu0 %v1338
    %1442 = vmatprep.subr.mxu0 %v1343
    %1443 = vmatpush1.msra.mxu0 %v1342
    %1444 = vmatprep.subr.mxu0 %v1347
    %1445 = vmatpush1.msra.mxu0 %v1346
    %1446 = vmatprep.subr.mxu0 %v1351
    %1447 = vmatpush1.msra.mxu0 %v1350
    %1448 = vmatprep.subr.mxu0 %v1355
    %1449 = vmatpush1.msra.mxu0 %v1354
    %1450 = vmatprep.subr.mxu0 %v1359
    %1451 = vmatpush1.msra.mxu0 %v1358
    %1452 = vmatprep.subr.mxu0 0.0
    %1453 = vmatpush1.msra.mxu0 0.0
    %1454 = vmatprep.subr.mxu0 0.0
    %1455 = vmatpush1.msra.mxu0 0.0
    %1456 = vmatprep.subr.mxu0 0.0
    %1457 = vmatpush1.msra.mxu0 0.0
    %1458 = vmatprep.subr.mxu0 0.0
    %1459 = vmatpush1.msra.mxu0 0.0
    %1460 = vmatprep.subr.mxu0 0.0
    %1461 = vmatpush1.msra.mxu0 0.0
    %1462 = vmatprep.subr.mxu0 0.0
    %1463 = vmatpush1.msra.mxu0 0.0
    %1464 = vmatprep.subr.mxu0 0.0
    %1465 = vmatpush1.msra.mxu0 0.0
    %1466 = vmatprep.subr.mxu0 0.0
    %1467 = vmatpush1.msra.mxu0 0.0
    %1468 = vmatprep.subr.mxu0 0.0
    %1469 = vmatpush1.msra.mxu0 0.0
    %1470 = vmatprep.subr.mxu0 0.0
    %1471 = vmatpush1.msra.mxu0 0.0
    %1472 = vmatprep.subr.mxu0 0.0
    %1473 = vmatpush1.msra.mxu0 0.0
    %1474 = vmatprep.subr.mxu0 0.0
    %1475 = vmatpush1.msra.mxu0 0.0
    %1476 = vmatprep.subr.mxu0 0.0
    %1477 = vmatpush1.msra.mxu0 0.0
    %1478 = vmatprep.subr.mxu0 0.0
    %1479 = vmatpush1.msra.mxu0 0.0
    %1480 = vmatprep.subr.mxu0 0.0
    %1481 = vmatpush1.msra.mxu0 0.0
    %1482 = vmatprep.subr.mxu0 0.0
    %1483 = vmatpush1.msra.mxu0 0.0
    %1484 = vmatprep.subr.mxu0 0.0
    %1485 = vmatpush1.msra.mxu0 0.0
    %1486 = vmatprep.subr.mxu0 0.0
    %1487 = vmatpush1.msra.mxu0 0.0
    %1488 = vmatprep.subr.mxu0 0.0
    %1489 = vmatpush1.msra.mxu0 0.0
    %1490 = vmatprep.subr.mxu0 0.0
    %1491 = vmatpush1.msra.mxu0 0.0
    %1492 = vmatprep.subr.mxu0 0.0
    %1493 = vmatpush1.msra.mxu0 0.0
    %1494 = vmatprep.subr.mxu0 0.0
    %1495 = vmatpush1.msra.mxu0 0.0
    %1496 = vmatprep.subr.mxu0 0.0
    %1497 = vmatpush1.msra.mxu0 0.0
    %1498 = vmatprep.mubr.f32.mxu0 0.0
    %1499 = vmatmul.mubr.f32.gmra.mrb[0].mxu0 %v1361
    %v1500 = vpop.f32.mrb[0].mxu0
    %v1501 = vadd.f32 0.0, %v1500
    %v1502 = vpop.f32.mrb[0].mxu0
    %v1503 = vadd.f32 0.0, %v1502
    %1504 = vdwg.mxu0
    %v1505 = vmul.f32 %v1430, 0.5
    %v1506 = vmul.f32 %v1432, 0.5
    %v1507 = vmul.f32 %v1501, 0.5
    %v1508 = vmul.f32 %v1503, 0.5
    %v1509 = vmul.f32 %v1430, 0.70710677
    %v1510 = vmul.f32 %v1432, 0.70710677
    %v1511 = vmul.f32 %v1501, 0.70710677
    %v1512 = vmul.f32 %v1503, 0.70710677
    %v1513 = vand.u32 2147483647, %v1509
    %v1514 = vand.u32 2147483647, %v1510
    %v1515 = vand.u32 2147483647, %v1511
    %v1516 = vand.u32 2147483647, %v1512
    %v1517 = vmul.f32 %v1513, 0.3275911
    %v1518 = vmul.f32 %v1514, 0.3275911
    %v1519 = vmul.f32 %v1515, 0.3275911
    %v1520 = vmul.f32 %v1516, 0.3275911
    %v1521 = vadd.f32 %v1517, 1.0
    %v1522 = vadd.f32 %v1518, 1.0
    %v1523 = vadd.f32 %v1519, 1.0
    %v1524 = vadd.f32 %v1520, 1.0
    %v1525 = vrcp.pop %v1521
    %v1526 = vrcp.pop %v1522
    %v1527 = vrcp.pop %v1523
    %v1528 = vrcp.pop %v1524
    %v1529 = vmul.f32 %v1521, %v1525
    %v1530 = vmul.f32 %v1522, %v1526
    %v1531 = vmul.f32 %v1523, %v1527
    %v1532 = vmul.f32 %v1524, %v1528
    %v1533 = vsub.f32 2.0, %v1529
    %v1534 = vsub.f32 2.0, %v1530
    %v1535 = vsub.f32 2.0, %v1531
    %v1536 = vsub.f32 2.0, %v1532
    %v1537 = vmul.f32 %v1525, %v1533
    %v1538 = vmul.f32 %v1526, %v1534
    %v1539 = vmul.f32 %v1527, %v1535
    %v1540 = vmul.f32 %v1528, %v1536
    %v1541 = vmul.f32 %v1537, 1.0614054
    %v1542 = vmul.f32 %v1538, 1.0614054
    %v1543 = vmul.f32 %v1539, 1.0614054
    %v1544 = vmul.f32 %v1540, 1.0614054
    %v1545 = vadd.f32 %v1541, -1.4531521
    %v1546 = vadd.f32 %v1542, -1.4531521
    %v1547 = vadd.f32 %v1543, -1.4531521
    %v1548 = vadd.f32 %v1544, -1.4531521
    %v1549 = vmul.f32 %v1537, %v1545
    %v1550 = vmul.f32 %v1538, %v1546
    %v1551 = vmul.f32 %v1539, %v1547
    %v1552 = vmul.f32 %v1540, %v1548
    %v1553 = vadd.f32 %v1549, 1.4214138
    %v1554 = vadd.f32 %v1550, 1.4214138
    %v1555 = vadd.f32 %v1551, 1.4214138
    %v1556 = vadd.f32 %v1552, 1.4214138
    %v1557 = vmul.f32 %v1537, %v1553
    %v1558 = vmul.f32 %v1538, %v1554
    %v1559 = vmul.f32 %v1539, %v1555
    %v1560 = vmul.f32 %v1540, %v1556
    %v1561 = vadd.f32 %v1557, -0.28449672
    %v1562 = vadd.f32 %v1558, -0.28449672
    %v1563 = vadd.f32 %v1559, -0.28449672
    %v1564 = vadd.f32 %v1560, -0.28449672
    %v1565 = vmul.f32 %v1537, %v1561
    %v1566 = vmul.f32 %v1538, %v1562
    %v1567 = vmul.f32 %v1539, %v1563
    %v1568 = vmul.f32 %v1540, %v1564
    %v1569 = vadd.f32 %v1565, 0.2548296
    %v1570 = vadd.f32 %v1566, 0.2548296
    %v1571 = vadd.f32 %v1567, 0.2548296
    %v1572 = vadd.f32 %v1568, 0.2548296
    %v1573 = vmul.f32 %v1537, %v1569
    %v1574 = vmul.f32 %v1538, %v1570
    %v1575 = vmul.f32 %v1539, %v1571
    %v1576 = vmul.f32 %v1540, %v1572
    %v1577 = vsub.f32 0.0, %v1513
    %v1578 = vsub.f32 0.0, %v1514
    %v1579 = vsub.f32 0.0, %v1515
    %v1580 = vsub.f32 0.0, %v1516
    %v1581 = vmul.f32 %v1577, %v1513
    %v1582 = vmul.f32 %v1578, %v1514
    %v1583 = vmul.f32 %v1579, %v1515
    %v1584 = vmul.f32 %v1580, %v1516
    %v1585 = vmul.f32 %v1581, 1.442695
    %v1586 = vpow.pop %v1585
    %v1587 = vmul.f32 %v1582, 1.442695
    %v1588 = vpow.pop %v1587
    %v1589 = vmul.f32 %v1583, 1.442695
    %v1590 = vpow.pop %v1589
    %v1591 = vmul.f32 %v1584, 1.442695
    %v1592 = vpow.pop %v1591
    %v1593 = vmul.f32 %v1573, %v1586
    %v1594 = vmul.f32 %v1574, %v1588
    %v1595 = vmul.f32 %v1575, %v1590
    %v1596 = vmul.f32 %v1576, %v1592
    %v1597 = vsub.f32 1.0, %v1593
    %v1598 = vsub.f32 1.0, %v1594
    %v1599 = vsub.f32 1.0, %v1595
    %v1600 = vsub.f32 1.0, %v1596
    %vm1601 = vcmp.ge.f32.partialorder %v1509, 0.0
    %vm1602 = vcmp.ge.f32.partialorder %v1510, 0.0
    %vm1603 = vcmp.ge.f32.partialorder %v1511, 0.0
    %vm1604 = vcmp.ge.f32.partialorder %v1512, 0.0
    %v1605 = vsub.f32 0.0, %v1597
    %v1606 = vsub.f32 0.0, %v1598
    %v1607 = vsub.f32 0.0, %v1599
    %v1608 = vsub.f32 0.0, %v1600
    %v1609 = vsel %vm1601, %v1597, %v1605
    %v1610 = vsel %vm1602, %v1598, %v1606
    %v1611 = vsel %vm1603, %v1599, %v1607
    %v1612 = vsel %vm1604, %v1600, %v1608
    %v1613 = vadd.f32 %v1609, 1.0
    %v1614 = vadd.f32 %v1610, 1.0
    %v1615 = vadd.f32 %v1611, 1.0
    %v1616 = vadd.f32 %v1612, 1.0
    %v1617 = vmul.f32 %v1505, %v1613
    %v1618 = vmul.f32 %v1506, %v1614
    %v1619 = vmul.f32 %v1507, %v1615
    %v1620 = vmul.f32 %v1508, %v1616
    %1621 = vrot.lane.b32.xlu0 %v1617, 17
    %v1622 = vpop.permute.xlu0 %1621
    %1623 = vrot.lane.b32.xlu0 %v1618, 17
    %v1624 = vpop.permute.xlu0 %1623
    %1625 = vrot.lane.b32.xlu0 %v1619, 17
    %v1626 = vpop.permute.xlu0 %1625
    %1627 = vrot.lane.b32.xlu0 %v1620, 17
    %v1628 = vpop.permute.xlu0 %1627
    %v1629 = vsel %vm73, %v1626, %v1628
    %v1630 = vsel %vm73, %v1624, %v1626
    %v1631 = vsel %vm73, %v1622, %v1624
    %v1632 = vsel %vm73, %v1628, %v1622
    %v1633 = vld [vmem:[#allocation10] sm:$0xf]
    %v1635 = vlaneseq
    %v1636 = vshrl.u32 %v1635, 7
    %v1637 = vsub.s32 0, %v1636
    %v1638 = vrot.slane %v1633, %v1637
    %v1639 = vlaneseq
    %v1640 = vshrl.u32 %v1639, 7
    %v1641 = vsub.s32 1, %v1640
    %v1642 = vrot.slane %v1633, %v1641
    %v1643 = vlaneseq
    %v1644 = vshrl.u32 %v1643, 7
    %v1645 = vsub.s32 2, %v1644
    %v1646 = vrot.slane %v1633, %v1645
    %v1647 = vlaneseq
    %v1648 = vshrl.u32 %v1647, 7
    %v1649 = vsub.s32 3, %v1648
    %v1650 = vrot.slane %v1633, %v1649
    %v1655 = vmul.f32 %v1632, %v1638
    %v1656 = vmul.f32 %v1631, %v1642
    %v1657 = vmul.f32 %v1630, %v1646
    %v1658 = vmul.f32 %v1629, %v1650
    %1659 = vst [vmem:[#allocation2] sm:$0xff] %v1655
    %1660 = vst [vmem:[#allocation2 + $0x8] sm:$0xff] %v1656
    %1661 = vst [vmem:[#allocation2 + $0x10] sm:$0xff] %v1657
    %1662 = vst [vmem:[#allocation2 + $0x18] sm:$0xff] %v1658
    %1663 = vrot.lane.b32.xlu0 %v1617, 16
    %v1664 = vpop.permute.xlu0 %1663
    %1665 = vrot.lane.b32.xlu0 %v1618, 16
    %v1666 = vpop.permute.xlu0 %1665
    %1667 = vrot.lane.b32.xlu0 %v1619, 16
    %v1668 = vpop.permute.xlu0 %1667
    %1669 = vrot.lane.b32.xlu0 %v1620, 16
    %v1670 = vpop.permute.xlu0 %1669
    %v1671 = vsel %vm116, %v1668, %v1670
    %v1672 = vsel %vm116, %v1666, %v1668
    %v1673 = vsel %vm116, %v1664, %v1666
    %v1674 = vsel %vm116, %v1670, %v1664
    %v1675 = vld [vmem:[%s121] sm:$0xf]
    %v1677 = vlaneseq
    %v1678 = vshrl.u32 %v1677, 7
    %v1679 = vsub.s32 0, %v1678
    %v1680 = vrot.slane %v1675, %v1679
    %v1681 = vlaneseq
    %v1682 = vshrl.u32 %v1681, 7
    %v1683 = vsub.s32 1, %v1682
    %v1684 = vrot.slane %v1675, %v1683
    %v1685 = vlaneseq
    %v1686 = vshrl.u32 %v1685, 7
    %v1687 = vsub.s32 2, %v1686
    %v1688 = vrot.slane %v1675, %v1687
    %v1689 = vlaneseq
    %v1690 = vshrl.u32 %v1689, 7
    %v1691 = vsub.s32 3, %v1690
    %v1692 = vrot.slane %v1675, %v1691
    %v1697 = vmul.f32 %v1674, %v1680
    %v1698 = vmul.f32 %v1673, %v1684
    %v1699 = vmul.f32 %v1672, %v1688
    %v1700 = vmul.f32 %v1671, %v1692
    %1701 = vst [vmem:[#allocation2 + $0x20] sm:$0xff] %v1697
    %1702 = vst [vmem:[#allocation2 + $0x28] sm:$0xff] %v1698
    %1703 = vst [vmem:[#allocation2 + $0x30] sm:$0xff] %v1699
    %1704 = vst [vmem:[#allocation2 + $0x38] sm:$0xff] %v1700
    %1705 = vrot.lane.b32.xlu0 %v1617, 15
    %v1706 = vpop.permute.xlu0 %1705
    %1707 = vrot.lane.b32.xlu0 %v1618, 15
    %v1708 = vpop.permute.xlu0 %1707
    %1709 = vrot.lane.b32.xlu0 %v1619, 15
    %v1710 = vpop.permute.xlu0 %1709
    %1711 = vrot.lane.b32.xlu0 %v1620, 15
    %v1712 = vpop.permute.xlu0 %1711
    %v1713 = vsel %vm160, %v1710, %v1712
    %v1714 = vsel %vm160, %v1708, %v1710
    %v1715 = vsel %vm160, %v1706, %v1708
    %v1716 = vsel %vm160, %v1712, %v1706
    %v1717 = vld [vmem:[%s165] sm:$0xf]
    %v1719 = vlaneseq
    %v1720 = vshrl.u32 %v1719, 7
    %v1721 = vsub.s32 0, %v1720
    %v1722 = vrot.slane %v1717, %v1721
    %v1723 = vlaneseq
    %v1724 = vshrl.u32 %v1723, 7
    %v1725 = vsub.s32 1, %v1724
    %v1726 = vrot.slane %v1717, %v1725
    %v1727 = vlaneseq
    %v1728 = vshrl.u32 %v1727, 7
    %v1729 = vsub.s32 2, %v1728
    %v1730 = vrot.slane %v1717, %v1729
    %v1731 = vlaneseq
    %v1732 = vshrl.u32 %v1731, 7
    %v1733 = vsub.s32 3, %v1732
    %v1734 = vrot.slane %v1717, %v1733
    %v1739 = vmul.f32 %v1716, %v1722
    %v1740 = vmul.f32 %v1715, %v1726
    %v1741 = vmul.f32 %v1714, %v1730
    %v1742 = vmul.f32 %v1713, %v1734
    %1743 = vst [vmem:[#allocation2 + $0x40] sm:$0xff] %v1739
    %1744 = vst [vmem:[#allocation2 + $0x48] sm:$0xff] %v1740
    %1745 = vst [vmem:[#allocation2 + $0x50] sm:$0xff] %v1741
    %1746 = vst [vmem:[#allocation2 + $0x58] sm:$0xff] %v1742
    %1747 = vrot.lane.b32.xlu0 %v1617, 1
    %v1748 = vpop.permute.xlu0 %1747
    %1749 = vrot.lane.b32.xlu0 %v1618, 1
    %v1750 = vpop.permute.xlu0 %1749
    %1751 = vrot.lane.b32.xlu0 %v1619, 1
    %v1752 = vpop.permute.xlu0 %1751
    %1753 = vrot.lane.b32.xlu0 %v1620, 1
    %v1754 = vpop.permute.xlu0 %1753
    %v1755 = vsel %vm204, %v1752, %v1754
    %v1756 = vsel %vm204, %v1750, %v1752
    %v1757 = vsel %vm204, %v1748, %v1750
    %v1758 = vsel %vm204, %v1754, %v1748
    %v1759 = vld [vmem:[%s209] sm:$0xf]
    %v1761 = vlaneseq
    %v1762 = vshrl.u32 %v1761, 7
    %v1763 = vsub.s32 0, %v1762
    %v1764 = vrot.slane %v1759, %v1763
    %v1765 = vlaneseq
    %v1766 = vshrl.u32 %v1765, 7
    %v1767 = vsub.s32 1, %v1766
    %v1768 = vrot.slane %v1759, %v1767
    %v1769 = vlaneseq
    %v1770 = vshrl.u32 %v1769, 7
    %v1771 = vsub.s32 2, %v1770
    %v1772 = vrot.slane %v1759, %v1771
    %v1773 = vlaneseq
    %v1774 = vshrl.u32 %v1773, 7
    %v1775 = vsub.s32 3, %v1774
    %v1776 = vrot.slane %v1759, %v1775
    %v1781 = vmul.f32 %v1758, %v1764
    %v1782 = vmul.f32 %v1757, %v1768
    %v1783 = vmul.f32 %v1756, %v1772
    %v1784 = vmul.f32 %v1755, %v1776
    %1785 = vst [vmem:[#allocation2 + $0x60] sm:$0xff] %v1781
    %1786 = vst [vmem:[#allocation2 + $0x68] sm:$0xff] %v1782
    %1787 = vst [vmem:[#allocation2 + $0x70] sm:$0xff] %v1783
    %1788 = vst [vmem:[#allocation2 + $0x78] sm:$0xff] %v1784
    %1789 = vst [vmem:[#allocation2 + $0x80] sm:$0xff] %v1617
    %1790 = vst [vmem:[#allocation2 + $0x88] sm:$0xff] %v1618
    %1791 = vst [vmem:[#allocation2 + $0x90] sm:$0xff] %v1619
    %1792 = vst [vmem:[#allocation2 + $0x98] sm:$0xff] %v1620
    %1793 = vrot.lane.b32.xlu0 %v1617, 127
    %v1794 = vpop.permute.xlu0 %1793
    %1795 = vrot.lane.b32.xlu0 %v1618, 127
    %v1796 = vpop.permute.xlu0 %1795
    %1797 = vrot.lane.b32.xlu0 %v1619, 127
    %v1798 = vpop.permute.xlu0 %1797
    %1799 = vrot.lane.b32.xlu0 %v1620, 127
    %v1800 = vpop.permute.xlu0 %1799
    %v1801 = vsel %vm252, %v1798, %v1800
    %v1802 = vsel %vm252, %v1796, %v1798
    %v1803 = vsel %vm252, %v1794, %v1796
    %v1804 = vsel %vm252, %v1800, %v1794
    %v1805 = vld [vmem:[%s257] sm:$0xf]
    %v1807 = vlaneseq
    %v1808 = vshrl.u32 %v1807, 7
    %v1809 = vsub.s32 0, %v1808
    %v1810 = vrot.slane %v1805, %v1809
    %v1811 = vlaneseq
    %v1812 = vshrl.u32 %v1811, 7
    %v1813 = vsub.s32 1, %v1812
    %v1814 = vrot.slane %v1805, %v1813
    %v1815 = vlaneseq
    %v1816 = vshrl.u32 %v1815, 7
    %v1817 = vsub.s32 2, %v1816
    %v1818 = vrot.slane %v1805, %v1817
    %v1819 = vlaneseq
    %v1820 = vshrl.u32 %v1819, 7
    %v1821 = vsub.s32 3, %v1820
    %v1822 = vrot.slane %v1805, %v1821
    %v1827 = vmul.f32 %v1803, %v1810
    %v1828 = vmul.f32 %v1802, %v1814
    %v1829 = vmul.f32 %v1801, %v1818
    %v1830 = vmul.f32 %v1804, %v1822
    %1831 = vst [vmem:[#allocation2 + $0xa0] sm:$0xff] %v1827
    %1832 = vst [vmem:[#allocation2 + $0xa8] sm:$0xff] %v1828
    %1833 = vst [vmem:[#allocation2 + $0xb0] sm:$0xff] %v1829
    %1834 = vst [vmem:[#allocation2 + $0xb8] sm:$0xff] %v1830
    %1835 = vrot.lane.b32.xlu0 %v1617, 113
    %v1836 = vpop.permute.xlu0 %1835
    %1837 = vrot.lane.b32.xlu0 %v1618, 113
    %v1838 = vpop.permute.xlu0 %1837
    %1839 = vrot.lane.b32.xlu0 %v1619, 113
    %v1840 = vpop.permute.xlu0 %1839
    %1841 = vrot.lane.b32.xlu0 %v1620, 113
    %v1842 = vpop.permute.xlu0 %1841
    %v1843 = vsel %vm296, %v1840, %v1842
    %v1844 = vsel %vm296, %v1838, %v1840
    %v1845 = vsel %vm296, %v1836, %v1838
    %v1846 = vsel %vm296, %v1842, %v1836
    %v1847 = vld [vmem:[%s301] sm:$0xf]
    %v1849 = vlaneseq
    %v1850 = vshrl.u32 %v1849, 7
    %v1851 = vsub.s32 0, %v1850
    %v1852 = vrot.slane %v1847, %v1851
    %v1853 = vlaneseq
    %v1854 = vshrl.u32 %v1853, 7
    %v1855 = vsub.s32 1, %v1854
    %v1856 = vrot.slane %v1847, %v1855
    %v1857 = vlaneseq
    %v1858 = vshrl.u32 %v1857, 7
    %v1859 = vsub.s32 2, %v1858
    %v1860 = vrot.slane %v1847, %v1859
    %v1861 = vlaneseq
    %v1862 = vshrl.u32 %v1861, 7
    %v1863 = vsub.s32 3, %v1862
    %v1864 = vrot.slane %v1847, %v1863
    %v1869 = vmul.f32 %v1845, %v1852
    %v1870 = vmul.f32 %v1844, %v1856
    %v1871 = vmul.f32 %v1843, %v1860
    %v1872 = vmul.f32 %v1846, %v1864
    %1873 = vst [vmem:[#allocation2 + $0xc0] sm:$0xff] %v1869
    %1874 = vst [vmem:[#allocation2 + $0xc8] sm:$0xff] %v1870
    %1875 = vst [vmem:[#allocation2 + $0xd0] sm:$0xff] %v1871
    %1876 = vst [vmem:[#allocation2 + $0xd8] sm:$0xff] %v1872
    %1877 = vrot.lane.b32.xlu0 %v1617, 112
    %v1878 = vpop.permute.xlu0 %1877
    %1879 = vrot.lane.b32.xlu0 %v1618, 112
    %v1880 = vpop.permute.xlu0 %1879
    %1881 = vrot.lane.b32.xlu0 %v1619, 112
    %v1882 = vpop.permute.xlu0 %1881
    %1883 = vrot.lane.b32.xlu0 %v1620, 112
    %v1884 = vpop.permute.xlu0 %1883
    %v1885 = vsel %vm340, %v1882, %v1884
    %v1886 = vsel %vm340, %v1880, %v1882
    %v1887 = vsel %vm340, %v1878, %v1880
    %v1888 = vsel %vm340, %v1884, %v1878
    %v1889 = vld [vmem:[%s345] sm:$0xf]
    %v1891 = vlaneseq
    %v1892 = vshrl.u32 %v1891, 7
    %v1893 = vsub.s32 0, %v1892
    %v1894 = vrot.slane %v1889, %v1893
    %v1895 = vlaneseq
    %v1896 = vshrl.u32 %v1895, 7
    %v1897 = vsub.s32 1, %v1896
    %v1898 = vrot.slane %v1889, %v1897
    %v1899 = vlaneseq
    %v1900 = vshrl.u32 %v1899, 7
    %v1901 = vsub.s32 2, %v1900
    %v1902 = vrot.slane %v1889, %v1901
    %v1903 = vlaneseq
    %v1904 = vshrl.u32 %v1903, 7
    %v1905 = vsub.s32 3, %v1904
    %v1906 = vrot.slane %v1889, %v1905
    %v1911 = vmul.f32 %v1887, %v1894
    %v1912 = vmul.f32 %v1886, %v1898
    %v1913 = vmul.f32 %v1885, %v1902
    %v1914 = vmul.f32 %v1888, %v1906
    %1915 = vst [vmem:[#allocation2 + $0xe0] sm:$0xff] %v1911
    %1916 = vst [vmem:[#allocation2 + $0xe8] sm:$0xff] %v1912
    %1917 = vst [vmem:[#allocation2 + $0xf0] sm:$0xff] %v1913
    %1918 = vst [vmem:[#allocation2 + $0xf8] sm:$0xff] %v1914
    %1919 = vrot.lane.b32.xlu0 %v1617, 111
    %v1920 = vpop.permute.xlu0 %1919
    %1921 = vrot.lane.b32.xlu0 %v1618, 111
    %v1922 = vpop.permute.xlu0 %1921
    %1923 = vrot.lane.b32.xlu0 %v1619, 111
    %v1924 = vpop.permute.xlu0 %1923
    %1925 = vrot.lane.b32.xlu0 %v1620, 111
    %v1926 = vpop.permute.xlu0 %1925
    %v1927 = vsel %vm384, %v1924, %v1926
    %v1928 = vsel %vm384, %v1922, %v1924
    %v1929 = vsel %vm384, %v1920, %v1922
    %v1930 = vsel %vm384, %v1926, %v1920
    %v1931 = vld [vmem:[%s389] sm:$0xf]
    %v1933 = vlaneseq
    %v1934 = vshrl.u32 %v1933, 7
    %v1935 = vsub.s32 0, %v1934
    %v1936 = vrot.slane %v1931, %v1935
    %v1937 = vlaneseq
    %v1938 = vshrl.u32 %v1937, 7
    %v1939 = vsub.s32 1, %v1938
    %v1940 = vrot.slane %v1931, %v1939
    %v1941 = vlaneseq
    %v1942 = vshrl.u32 %v1941, 7
    %v1943 = vsub.s32 2, %v1942
    %v1944 = vrot.slane %v1931, %v1943
    %v1945 = vlaneseq
    %v1946 = vshrl.u32 %v1945, 7
    %v1947 = vsub.s32 3, %v1946
    %v1948 = vrot.slane %v1931, %v1947
    %v1953 = vmul.f32 %v1929, %v1936
    %v1954 = vmul.f32 %v1928, %v1940
    %v1955 = vmul.f32 %v1927, %v1944
    %v1956 = vmul.f32 %v1930, %v1948
    %1957 = vst [vmem:[#allocation2 + $0x100] sm:$0xff] %v1953
    %1958 = vst [vmem:[#allocation2 + $0x108] sm:$0xff] %v1954
    %1959 = vst [vmem:[#allocation2 + $0x110] sm:$0xff] %v1955
    %1960 = vst [vmem:[#allocation2 + $0x118] sm:$0xff] %v1956
    %s1961 = scalar_lea.vmem [#allocation8], 24
    %v1962 = vld [vmem:[%s1961] sm:$0xff]
    %v1963 = vld [vmem:[#allocation2] sm:$0xff]
    %v1964 = vld [vmem:[#allocation2 + $0x8] sm:$0xff]
    %v1965 = vld [vmem:[#allocation2 + $0x10] sm:$0xff]
    %v1966 = vld [vmem:[#allocation2 + $0x18] sm:$0xff]
    %v1967 = vld [vmem:[#allocation2 + $0x20] sm:$0xff]
    %v1968 = vld [vmem:[#allocation2 + $0x28] sm:$0xff]
    %v1969 = vld [vmem:[#allocation2 + $0x30] sm:$0xff]
    %v1970 = vld [vmem:[#allocation2 + $0x38] sm:$0xff]
    %v1971 = vld [vmem:[#allocation2 + $0x40] sm:$0xff]
    %v1972 = vld [vmem:[#allocation2 + $0x48] sm:$0xff]
    %v1973 = vld [vmem:[#allocation2 + $0x50] sm:$0xff]
    %v1974 = vld [vmem:[#allocation2 + $0x58] sm:$0xff]
    %v1975 = vld [vmem:[#allocation2 + $0x60] sm:$0xff]
    %v1976 = vld [vmem:[#allocation2 + $0x68] sm:$0xff]
    %v1977 = vld [vmem:[#allocation2 + $0x70] sm:$0xff]
    %v1978 = vld [vmem:[#allocation2 + $0x78] sm:$0xff]
    %v1979 = vld [vmem:[#allocation2 + $0x80] sm:$0xff]
    %v1980 = vld [vmem:[#allocation2 + $0x88] sm:$0xff]
    %v1981 = vld [vmem:[#allocation2 + $0x90] sm:$0xff]
    %v1982 = vld [vmem:[#allocation2 + $0x98] sm:$0xff]
    %v1983 = vld [vmem:[#allocation2 + $0xa0] sm:$0xff]
    %v1984 = vld [vmem:[#allocation2 + $0xa8] sm:$0xff]
    %v1985 = vld [vmem:[#allocation2 + $0xb0] sm:$0xff]
    %v1986 = vld [vmem:[#allocation2 + $0xb8] sm:$0xff]
    %v1987 = vld [vmem:[#allocation2 + $0xc0] sm:$0xff]
    %v1988 = vld [vmem:[#allocation2 + $0xc8] sm:$0xff]
    %v1989 = vld [vmem:[#allocation2 + $0xd0] sm:$0xff]
    %v1990 = vld [vmem:[#allocation2 + $0xd8] sm:$0xff]
    %v1991 = vld [vmem:[#allocation2 + $0xe0] sm:$0xff]
    %v1992 = vld [vmem:[#allocation2 + $0xe8] sm:$0xff]
    %v1993 = vld [vmem:[#allocation2 + $0xf0] sm:$0xff]
    %v1994 = vld [vmem:[#allocation2 + $0xf8] sm:$0xff]
    %v1995 = vld [vmem:[#allocation2 + $0x100] sm:$0xff]
    %v1996 = vld [vmem:[#allocation2 + $0x108] sm:$0xff]
    %v1997 = vld [vmem:[#allocation2 + $0x110] sm:$0xff]
    %v1998 = vld [vmem:[#allocation2 + $0x118] sm:$0xff]
    %v2000 = vsel %vm457, %v1962, 0
    %2002 = vmatprep.subr.mxu0 %v1964
    %2003 = vmatpush1.msra.mxu0 %v1963
    %2004 = vmatprep.subr.mxu0 %v1968
    %2005 = vmatpush1.msra.mxu0 %v1967
    %2006 = vmatprep.subr.mxu0 %v1972
    %2007 = vmatpush1.msra.mxu0 %v1971
    %2008 = vmatprep.subr.mxu0 %v1976
    %2009 = vmatpush1.msra.mxu0 %v1975
    %2010 = vmatprep.subr.mxu0 %v1980
    %2011 = vmatpush1.msra.mxu0 %v1979
    %2012 = vmatprep.subr.mxu0 %v1984
    %2013 = vmatpush1.msra.mxu0 %v1983
    %2014 = vmatprep.subr.mxu0 %v1988
    %2015 = vmatpush1.msra.mxu0 %v1987
    %2016 = vmatprep.subr.mxu0 %v1992
    %2017 = vmatpush1.msra.mxu0 %v1991
    %2018 = vmatprep.subr.mxu0 %v1996
    %2019 = vmatpush1.msra.mxu0 %v1995
    %2020 = vmatprep.subr.mxu0 0.0
    %2021 = vmatpush1.msra.mxu0 0.0
    %2022 = vmatprep.subr.mxu0 0.0
    %2023 = vmatpush1.msra.mxu0 0.0
    %2024 = vmatprep.subr.mxu0 0.0
    %2025 = vmatpush1.msra.mxu0 0.0
    %2026 = vmatprep.subr.mxu0 0.0
    %2027 = vmatpush1.msra.mxu0 0.0
    %2028 = vmatprep.subr.mxu0 0.0
    %2029 = vmatpush1.msra.mxu0 0.0
    %2030 = vmatprep.subr.mxu0 0.0
    %2031 = vmatpush1.msra.mxu0 0.0
    %2032 = vmatprep.subr.mxu0 0.0
    %2033 = vmatpush1.msra.mxu0 0.0
    %2034 = vmatprep.subr.mxu0 0.0
    %2035 = vmatpush1.msra.mxu0 0.0
    %2036 = vmatprep.subr.mxu0 0.0
    %2037 = vmatpush1.msra.mxu0 0.0
    %2038 = vmatprep.subr.mxu0 0.0
    %2039 = vmatpush1.msra.mxu0 0.0
    %2040 = vmatprep.subr.mxu0 0.0
    %2041 = vmatpush1.msra.mxu0 0.0
    %2042 = vmatprep.subr.mxu0 0.0
    %2043 = vmatpush1.msra.mxu0 0.0
    %2044 = vmatprep.subr.mxu0 0.0
    %2045 = vmatpush1.msra.mxu0 0.0
    %2046 = vmatprep.subr.mxu0 0.0
    %2047 = vmatpush1.msra.mxu0 0.0
    %2048 = vmatprep.subr.mxu0 0.0
    %2049 = vmatpush1.msra.mxu0 0.0
    %2050 = vmatprep.subr.mxu0 0.0
    %2051 = vmatpush1.msra.mxu0 0.0
    %2052 = vmatprep.subr.mxu0 0.0
    %2053 = vmatpush1.msra.mxu0 0.0
    %2054 = vmatprep.subr.mxu0 0.0
    %2055 = vmatpush1.msra.mxu0 0.0
    %2056 = vmatprep.subr.mxu0 0.0
    %2057 = vmatpush1.msra.mxu0 0.0
    %2058 = vmatprep.subr.mxu0 0.0
    %2059 = vmatpush1.msra.mxu0 0.0
    %2060 = vmatprep.subr.mxu0 0.0
    %2061 = vmatpush1.msra.mxu0 0.0
    %2062 = vmatprep.subr.mxu0 0.0
    %2063 = vmatpush1.msra.mxu0 0.0
    %2064 = vmatprep.subr.mxu0 0.0
    %2065 = vmatpush1.msra.mxu0 0.0
    %2066 = vmatprep.mubr.f32.mxu0 0.0
    %2067 = vmatmul.mubr.f32.gmra.mrb[0].mxu0 %v2000
    %v2068 = vpop.f32.mrb[0].mxu0
    %v2069 = vadd.f32 0.0, %v2068
    %v2070 = vpop.f32.mrb[0].mxu0
    %v2071 = vadd.f32 0.0, %v2070
    %2072 = vdwg.mxu0
    %2073 = vmatprep.subr.mxu0 %v1966
    %2074 = vmatpush1.msra.mxu0 %v1965
    %2075 = vmatprep.subr.mxu0 %v1970
    %2076 = vmatpush1.msra.mxu0 %v1969
    %2077 = vmatprep.subr.mxu0 %v1974
    %2078 = vmatpush1.msra.mxu0 %v1973
    %2079 = vmatprep.subr.mxu0 %v1978
    %2080 = vmatpush1.msra.mxu0 %v1977
    %2081 = vmatprep.subr.mxu0 %v1982
    %2082 = vmatpush1.msra.mxu0 %v1981
    %2083 = vmatprep.subr.mxu0 %v1986
    %2084 = vmatpush1.msra.mxu0 %v1985
    %2085 = vmatprep.subr.mxu0 %v1990
    %2086 = vmatpush1.msra.mxu0 %v1989
    %2087 = vmatprep.subr.mxu0 %v1994
    %2088 = vmatpush1.msra.mxu0 %v1993
    %2089 = vmatprep.subr.mxu0 %v1998
    %2090 = vmatpush1.msra.mxu0 %v1997
    %2091 = vmatprep.subr.mxu0 0.0
    %2092 = vmatpush1.msra.mxu0 0.0
    %2093 = vmatprep.subr.mxu0 0.0
    %2094 = vmatpush1.msra.mxu0 0.0
    %2095 = vmatprep.subr.mxu0 0.0
    %2096 = vmatpush1.msra.mxu0 0.0
    %2097 = vmatprep.subr.mxu0 0.0
    %2098 = vmatpush1.msra.mxu0 0.0
    %2099 = vmatprep.subr.mxu0 0.0
    %2100 = vmatpush1.msra.mxu0 0.0
    %2101 = vmatprep.subr.mxu0 0.0
    %2102 = vmatpush1.msra.mxu0 0.0
    %2103 = vmatprep.subr.mxu0 0.0
    %2104 = vmatpush1.msra.mxu0 0.0
    %2105 = vmatprep.subr.mxu0 0.0
    %2106 = vmatpush1.msra.mxu0 0.0
    %2107 = vmatprep.subr.mxu0 0.0
    %2108 = vmatpush1.msra.mxu0 0.0
    %2109 = vmatprep.subr.mxu0 0.0
    %2110 = vmatpush1.msra.mxu0 0.0
    %2111 = vmatprep.subr.mxu0 0.0
    %2112 = vmatpush1.msra.mxu0 0.0
    %2113 = vmatprep.subr.mxu0 0.0
    %2114 = vmatpush1.msra.mxu0 0.0
    %2115 = vmatprep.subr.mxu0 0.0
    %2116 = vmatpush1.msra.mxu0 0.0
    %2117 = vmatprep.subr.mxu0 0.0
    %2118 = vmatpush1.msra.mxu0 0.0
    %2119 = vmatprep.subr.mxu0 0.0
    %2120 = vmatpush1.msra.mxu0 0.0
    %2121 = vmatprep.subr.mxu0 0.0
    %2122 = vmatpush1.msra.mxu0 0.0
    %2123 = vmatprep.subr.mxu0 0.0
    %2124 = vmatpush1.msra.mxu0 0.0
    %2125 = vmatprep.subr.mxu0 0.0
    %2126 = vmatpush1.msra.mxu0 0.0
    %2127 = vmatprep.subr.mxu0 0.0
    %2128 = vmatpush1.msra.mxu0 0.0
    %2129 = vmatprep.subr.mxu0 0.0
    %2130 = vmatpush1.msra.mxu0 0.0
    %2131 = vmatprep.subr.mxu0 0.0
    %2132 = vmatpush1.msra.mxu0 0.0
    %2133 = vmatprep.subr.mxu0 0.0
    %2134 = vmatpush1.msra.mxu0 0.0
    %2135 = vmatprep.subr.mxu0 0.0
    %2136 = vmatpush1.msra.mxu0 0.0
    %2137 = vmatprep.mubr.f32.mxu0 0.0
    %2138 = vmatmul.mubr.f32.gmra.mrb[0].mxu0 %v2000
    %v2139 = vpop.f32.mrb[0].mxu0
    %v2140 = vadd.f32 0.0, %v2139
    %v2141 = vpop.f32.mrb[0].mxu0
    %v2142 = vadd.f32 0.0, %v2141
    %2143 = vdwg.mxu0
    %v2144 = vmul.f32 %v2069, 0.5
    %v2145 = vmul.f32 %v2071, 0.5
    %v2146 = vmul.f32 %v2140, 0.5
    %v2147 = vmul.f32 %v2142, 0.5
    %v2148 = vmul.f32 %v2069, 0.70710677
    %v2149 = vmul.f32 %v2071, 0.70710677
    %v2150 = vmul.f32 %v2140, 0.70710677
    %v2151 = vmul.f32 %v2142, 0.70710677
    %v2152 = vand.u32 2147483647, %v2148
    %v2153 = vand.u32 2147483647, %v2149
    %v2154 = vand.u32 2147483647, %v2150
    %v2155 = vand.u32 2147483647, %v2151
    %v2156 = vmul.f32 %v2152, 0.3275911
    %v2157 = vmul.f32 %v2153, 0.3275911
    %v2158 = vmul.f32 %v2154, 0.3275911
    %v2159 = vmul.f32 %v2155, 0.3275911
    %v2160 = vadd.f32 %v2156, 1.0
    %v2161 = vadd.f32 %v2157, 1.0
    %v2162 = vadd.f32 %v2158, 1.0
    %v2163 = vadd.f32 %v2159, 1.0
    %v2164 = vrcp.pop %v2160
    %v2165 = vrcp.pop %v2161
    %v2166 = vrcp.pop %v2162
    %v2167 = vrcp.pop %v2163
    %v2168 = vmul.f32 %v2160, %v2164
    %v2169 = vmul.f32 %v2161, %v2165
    %v2170 = vmul.f32 %v2162, %v2166
    %v2171 = vmul.f32 %v2163, %v2167
    %v2172 = vsub.f32 2.0, %v2168
    %v2173 = vsub.f32 2.0, %v2169
    %v2174 = vsub.f32 2.0, %v2170
    %v2175 = vsub.f32 2.0, %v2171
    %v2176 = vmul.f32 %v2164, %v2172
    %v2177 = vmul.f32 %v2165, %v2173
    %v2178 = vmul.f32 %v2166, %v2174
    %v2179 = vmul.f32 %v2167, %v2175
    %v2180 = vmul.f32 %v2176, 1.0614054
    %v2181 = vmul.f32 %v2177, 1.0614054
    %v2182 = vmul.f32 %v2178, 1.0614054
    %v2183 = vmul.f32 %v2179, 1.0614054
    %v2184 = vadd.f32 %v2180, -1.4531521
    %v2185 = vadd.f32 %v2181, -1.4531521
    %v2186 = vadd.f32 %v2182, -1.4531521
    %v2187 = vadd.f32 %v2183, -1.4531521
    %v2188 = vmul.f32 %v2176, %v2184
    %v2189 = vmul.f32 %v2177, %v2185
    %v2190 = vmul.f32 %v2178, %v2186
    %v2191 = vmul.f32 %v2179, %v2187
    %v2192 = vadd.f32 %v2188, 1.4214138
    %v2193 = vadd.f32 %v2189, 1.4214138
    %v2194 = vadd.f32 %v2190, 1.4214138
    %v2195 = vadd.f32 %v2191, 1.4214138
    %v2196 = vmul.f32 %v2176, %v2192
    %v2197 = vmul.f32 %v2177, %v2193
    %v2198 = vmul.f32 %v2178, %v2194
    %v2199 = vmul.f32 %v2179, %v2195
    %v2200 = vadd.f32 %v2196, -0.28449672
    %v2201 = vadd.f32 %v2197, -0.28449672
    %v2202 = vadd.f32 %v2198, -0.28449672
    %v2203 = vadd.f32 %v2199, -0.28449672
    %v2204 = vmul.f32 %v2176, %v2200
    %v2205 = vmul.f32 %v2177, %v2201
    %v2206 = vmul.f32 %v2178, %v2202
    %v2207 = vmul.f32 %v2179, %v2203
    %v2208 = vadd.f32 %v2204, 0.2548296
    %v2209 = vadd.f32 %v2205, 0.2548296
    %v2210 = vadd.f32 %v2206, 0.2548296
    %v2211 = vadd.f32 %v2207, 0.2548296
    %v2212 = vmul.f32 %v2176, %v2208
    %v2213 = vmul.f32 %v2177, %v2209
    %v2214 = vmul.f32 %v2178, %v2210
    %v2215 = vmul.f32 %v2179, %v2211
    %v2216 = vsub.f32 0.0, %v2152
    %v2217 = vsub.f32 0.0, %v2153
    %v2218 = vsub.f32 0.0, %v2154
    %v2219 = vsub.f32 0.0, %v2155
    %v2220 = vmul.f32 %v2216, %v2152
    %v2221 = vmul.f32 %v2217, %v2153
    %v2222 = vmul.f32 %v2218, %v2154
    %v2223 = vmul.f32 %v2219, %v2155
    %v2224 = vmul.f32 %v2220, 1.442695
    %v2225 = vpow.pop %v2224
    %v2226 = vmul.f32 %v2221, 1.442695
    %v2227 = vpow.pop %v2226
    %v2228 = vmul.f32 %v2222, 1.442695
    %v2229 = vpow.pop %v2228
    %v2230 = vmul.f32 %v2223, 1.442695
    %v2231 = vpow.pop %v2230
    %v2232 = vmul.f32 %v2212, %v2225
    %v2233 = vmul.f32 %v2213, %v2227
    %v2234 = vmul.f32 %v2214, %v2229
    %v2235 = vmul.f32 %v2215, %v2231
    %v2236 = vsub.f32 1.0, %v2232
    %v2237 = vsub.f32 1.0, %v2233
    %v2238 = vsub.f32 1.0, %v2234
    %v2239 = vsub.f32 1.0, %v2235
    %vm2240 = vcmp.ge.f32.partialorder %v2148, 0.0
    %vm2241 = vcmp.ge.f32.partialorder %v2149, 0.0
    %vm2242 = vcmp.ge.f32.partialorder %v2150, 0.0
    %vm2243 = vcmp.ge.f32.partialorder %v2151, 0.0
    %v2244 = vsub.f32 0.0, %v2236
    %v2245 = vsub.f32 0.0, %v2237
    %v2246 = vsub.f32 0.0, %v2238
    %v2247 = vsub.f32 0.0, %v2239
    %v2248 = vsel %vm2240, %v2236, %v2244
    %v2249 = vsel %vm2241, %v2237, %v2245
    %v2250 = vsel %vm2242, %v2238, %v2246
    %v2251 = vsel %vm2243, %v2239, %v2247
    %v2252 = vadd.f32 %v2248, 1.0
    %v2253 = vadd.f32 %v2249, 1.0
    %v2254 = vadd.f32 %v2250, 1.0
    %v2255 = vadd.f32 %v2251, 1.0
    %v2256 = vmul.f32 %v2144, %v2252
    %v2257 = vmul.f32 %v2145, %v2253
    %v2258 = vmul.f32 %v2146, %v2254
    %v2259 = vmul.f32 %v2147, %v2255
    %s2260 = sld [smem:[#allocation4]]
    %v2261 = vstv %s2260
    %v2262 = vmul.f32 %v2261, %v715
    %v2263 = vmul.f32 %v2261, %v716
    %v2264 = vmul.f32 %v2261, %v717
    %v2265 = vmul.f32 %v2261, %v718
    %s2266 = sld [smem:[#allocation4 + $0x1]]
    %v2267 = vstv %s2266
    %v2268 = vmul.f32 %v2267, %v2256
    %v2269 = vmul.f32 %v2267, %v2257
    %v2270 = vmul.f32 %v2267, %v2258
    %v2271 = vmul.f32 %v2267, %v2259
    %v2272 = vadd.f32 %v2262, %v2268
    %v2273 = vadd.f32 %v2263, %v2269
    %v2274 = vadd.f32 %v2264, %v2270
    %v2275 = vadd.f32 %v2265, %v2271
    %2276 = vst [vmem:[#allocation11] sm:$0xff] %v2272
    %2277 = vst [vmem:[#allocation11 + $0x8] sm:$0xff] %v2273
    %2278 = vst [vmem:[#allocation11 + $0x10] sm:$0xff] %v2274
    %2279 = vst [vmem:[#allocation11 + $0x18] sm:$0xff] %v2275
    // Predicated region
    $region26: #{tpu_custom_call.1} parent=1 // pred_check
      _
    $region27: #{tpu_custom_call.1} parent=1 // pred_check_branch
      %2281 = sbr.rel (0) target = $region29
    $region28: #{tpu_custom_call.1} parent=1 // pred_region
      %s2283 = ssub.s32 512, 512
      %2284 = vsyncadd [#allocation7], %s2283
      %s2286 = sshll.u32 [#allocation11], 4
      %s2287 = int_to_ptr.vmem [resolvable:$true] %s2286
      %2289 = dma.vmem_to_hbm [thread:$0]  %s2287, 512, %s4, [#allocation7]
    $region29: #{tpu_custom_call.1} parent=1 // pred_fallthru
      _
    // Predicated region
    $region30: #{tpu_custom_call.1} parent=1 // pred_check
      _
    $region31: #{tpu_custom_call.1} parent=1 // pred_check_branch
      %2291 = sbr.rel (0) target = $region33
    $region32: #{tpu_custom_call.1} parent=1 // pred_region
      %2292 = dma.done [#allocation7], 512
    $region33: #{tpu_custom_call.1} parent=1 // pred_fallthru
      _
    %2293 = vsyncpa [#allocation6], 1
    %2294 = vsyncpa [#allocation9], 1
    %2295 = vsyncpa [#allocation7], 1

</llo_original>
